<compile_context>
chip_gen: v6e
topology: v6e:2x2x1
jax: 0.10.0
libtpu: 0.0.40
codegen_flags: <defaults>
</compile_context>

<pallas_src>
import functools
import math

import jax
import jax.numpy as jnp
from jax.experimental import pallas as pl
from jax.experimental.pallas import tpu as pltpu


_MXU_DTYPES = {None: None, "bfloat16": jnp.bfloat16, "float32": jnp.float32}


def _pick_batch_block(batch, nq, itemsize, row_target):
    """Batch elements per grid step.

    Targets, in priority order:
      * bt*nq aligned to the sublane count (8 for 4-byte, 16 for 2-byte dtypes),
      * an even number of grid steps (>= 2 keeps both v7x TensorCores busy via the
        'parallel' grid axis; irrelevant but harmless on single-TC v5e/v6e),
      * as many rows per projection matmul as possible, capped by `row_target`.
    """
    sub = 8 if itemsize >= 4 else 16
    divisors = [d for d in range(1, batch + 1) if batch % d == 0]
    cand = [d for d in divisors if d * nq <= row_target] or [1]
    if batch >= 2:
        multi = [d for d in cand if batch // d >= 2]
        if multi:                      # keep >= 2 grid steps whenever batch allows
            cand = multi

    def score(d):
        rows = d * nq
        return (rows % sub == 0, (batch // d) % 2 == 0, rows)

    return max(cand, key=score)


def _vmem_budget(bt, nq, nk, nv, cq, ck, cv, dim, hd, out_dim,
                 q_dt, k_dt, v_dt, bias_dt, weights):
    """Per-step VMEM footprint in bytes, clamped to a generation-aware cap."""
    def nbytes(elems, dt):
        return int(elems) * dt.itemsize

    # Pipelined activation blocks are double-buffered by Pallas (counted in their
    # actual dtypes — the bias may be f32 even when activations are bf16).
    act = 2 * (nbytes(bt * nq * cq, q_dt) + nbytes(bt * nk * ck, k_dt)
               + nbytes(bt * nv * cv, v_dt) + nbytes(bt * nq * out_dim, q_dt))
    if bias_dt is not None:
        act += 2 * nbytes(bt * nq * nk, bias_dt)
    # Whole-array VMEM weights: resident once (not pipelined / not double-buffered).
    w = sum(int(a.size) * a.dtype.itemsize for a in weights)
    # f32 intermediates: qp/kp/vp, logits + exp, one head ctx, output accumulator.
    inter = 4 * bt * (nq * dim + nk * dim + nv * dim
                      + 2 * nq * nk + nq * hd + nq * out_dim)
    need = act + w + 2 * inter                     # ~2x headroom on intermediates

    try:
        cap = int(pltpu.get_tpu_info().vmem_capacity_bytes)
    except Exception:                              # pragma: no cover
        cap = 64 * 2 ** 20                         # conservative: v7x per-TC VMEM
    # ~90% of physical per-core VMEM (v7x: 64 MiB, v5e/v6e: 128 MiB).
    return int(min(max(need, 32 * 2 ** 20), int(0.9 * cap)))


def _make_kernel(scale, attn_act, num_heads, has_bias, mxu_dtype):
    def kernel(*refs):
        if has_bias:
            (q_ref, k_ref, v_ref, bias_ref,
             wq, bq, wk, bk, wv, bv, wp, bp, out_ref) = refs
        else:
            (q_ref, k_ref, v_ref,
             wq, bq, wk, bk, wv, bv, wp, bp, out_ref) = refs
            bias_ref = None

        f32 = jnp.float32
        bt, nq, cq = q_ref.shape
        _, nk, ck = k_ref.shape
        _, nv, cv = v_ref.shape
        dim = wq.shape[1]
        out_dim = wp.shape[1]
        hd = dim // num_heads
        # MXU operand dtype: input dtype by default, optional bf16 downcast.
        cdt = _MXU_DTYPES[mxu_dtype] or q_ref.dtype

        # --- fused q/k/v projections: batch block folded into rows (M = bt*n) ---
        q2 = q_ref[...].reshape(bt * nq, cq).astype(cdt)
        k2 = k_ref[...].reshape(bt * nk, ck).astype(cdt)
        v2 = v_ref[...].reshape(bt * nv, cv).astype(cdt)
        # scale applied ONCE to q (identical to scaling the logits, incl. bias).
        qp = ((jnp.dot(q2, wq[...].astype(cdt), preferred_element_type=f32)
               + bq[...].astype(f32)) * scale).astype(cdt).reshape(bt, nq, dim)
        kp = (jnp.dot(k2, wk[...].astype(cdt), preferred_element_type=f32)
              + bk[...].astype(f32)).astype(cdt).reshape(bt, nk, dim)
        vp = (jnp.dot(v2, wv[...].astype(cdt), preferred_element_type=f32)
              + bv[...].astype(f32)).astype(cdt).reshape(bt, nv, dim)

        bias = bias_ref[...].astype(f32) if has_bias else None      # (bt, nq, nk)

        wp_full = wp[...].astype(cdt)                                # (dim, out_dim)
        # Output accumulator initialized with the projection bias; the output
        # projection is accumulated per head => no lane-axis concat, single f32
        # accumulator live across heads.
        out_acc = jnp.broadcast_to(bp[...].astype(f32), (bt * nq, out_dim))

        for h in range(num_heads):                 # num_heads static -> unrolled
            lo = h * hd
            qh = qp[:, :, lo:lo + hd]              # static lane slices
            kh = kp[:, :, lo:lo + hd]
            vh = vp[:, :, lo:lo + hd]
            logits = jnp.einsum("bqd,bkd->bqk", qh, kh,
                                preferred_element_type=f32)          # (bt, nq, nk)
            if has_bias:
                logits = logits + bias
            if attn_act == "softmax":
                m = jnp.max(logits, axis=-1, keepdims=True)
                e = jnp.exp(logits - m)
                denom = jnp.sum(e, axis=-1, keepdims=True)
                attn = e * pl.reciprocal(denom, approx=True)         # EUP, ~free
            elif attn_act == "sigmoid":
                attn = jax.nn.sigmoid(logits)
            else:
                raise NotImplementedError(attn_act)
            # TODO(synk): training-mode attn_drop/proj_drop and ret_attn=True
            # (returning the attention map) are not implemented (eval forward only).
            ctx = jnp.einsum("bqk,bkd->bqd", attn.astype(cdt), vh,
                             preferred_element_type=f32)             # (bt, nq, hd)
            out_acc = out_acc + jnp.dot(
                ctx.reshape(bt * nq, hd).astype(cdt),
                wp_full[lo:lo + hd, :], preferred_element_type=f32)

        out_ref[...] = out_acc.reshape(bt, nq, out_dim).astype(out_ref.dtype)

    return kernel


@functools.partial(
    jax.jit,
    static_argnames=("num_heads", "attn_act", "row_block_target", "mxu_dtype"))
def full_attn(query, key, value, params, att_bias=None, *, num_heads=1,
              attn_act="softmax", row_block_target=512, mxu_dtype=None):
    """Pallas implementation of FullAttnModule.forward (eval mode)."""
    assert attn_act in ("softmax", "sigmoid"), attn_act
    assert mxu_dtype in _MXU_DTYPES, mxu_dtype
    B, nq, cq = query.shape
    _, nk, ck = key.shape
    _, nv, cv = value.shape
    assert nk == nv, "attention requires nk == nv"

    wq_t, bq = params["wq_t"], params["bq"]
    wk_t, bk = params["wk_t"], params["bk"]
    wv_t, bv = params["wv_t"], params["bv"]
    wp_t, bp = params["wproj_t"], params["bproj"]
    dim = wq_t.shape[1]
    out_dim = wp_t.shape[1]
    assert dim % num_heads == 0
    head_dim = dim // num_heads
    scale = float(head_dim) ** (-0.5)

    bt = _pick_batch_block(B, nq, query.dtype.itemsize, row_block_target)
    grid = (B // bt,)
    has_bias = att_bias is not None

    act_spec = lambda n, c: pl.BlockSpec((bt, n, c), lambda b: (b, 0, 0))
    # Whole-array VMEM residents: copied in once, NOT part of the double-buffered
    # pipeline (single copy of the weights in VMEM).
    w_spec = pl.BlockSpec(memory_space=pltpu.MemorySpace.VMEM)

    in_specs = [act_spec(nq, cq), act_spec(nk, ck), act_spec(nv, cv)]
    inputs = [query, key, value]
    if has_bias:
        in_specs.append(act_spec(nq, nk))
        inputs.append(att_bias.reshape(B, nq, nk))
    weights = [wq_t, bq, wk_t, bk, wv_t, bv, wp_t, bp]
    in_specs += [w_spec] * len(weights)
    inputs += weights

    vmem_limit = _vmem_budget(
        bt, nq, nk, nv, cq, ck, cv, dim, head_dim, out_dim,
        query.dtype, key.dtype, value.dtype,
        att_bias.dtype if has_bias else None, weights)

    kernel = _make_kernel(scale, attn_act, num_heads, has_bias, mxu_dtype)
    out = pl.pallas_call(
        kernel,
        out_shape=jax.ShapeDtypeStruct((B, nq, out_dim), query.dtype),
        grid=grid,
        in_specs=in_specs,
        out_specs=pl.BlockSpec((bt, nq, out_dim), lambda b: (b, 0, 0)),
        compiler_params=pltpu.CompilerParams(
            dimension_semantics=("parallel",),
            vmem_limit_bytes=vmem_limit),
    )(*inputs)
    return out


def init_params(key, dim, num_heads, out_dim=None, qkv_bias=True,
                q_extra_dim=0, k_extra_dim=0, v_extra_dim=0, dtype=jnp.float32):
    """Deterministic synthetic init mimicking nn.Linear (uniform +/- 1/sqrt(fan_in)).

    qkv_bias=False is represented by zero biases (mathematically identical)."""
    if out_dim is None:
        out_dim = dim
    keys = jax.random.split(key, 8)

    def linear(kw, kb, fan_in, fan_out, use_bias=True):
        bound = 1.0 / math.sqrt(fan_in)
        w_t = jax.random.uniform(kw, (fan_in, fan_out), dtype, -bound, bound)
        b = (jax.random.uniform(kb, (1, fan_out), dtype, -bound, bound)
             if use_bias else jnp.zeros((1, fan_out), dtype))
        return w_t, b

    wq_t, bq = linear(keys[0], keys[1], dim + q_extra_dim, dim, qkv_bias)
    wk_t, bk = linear(keys[2], keys[3], dim + k_extra_dim, dim, qkv_bias)
    wv_t, bv = linear(keys[4], keys[5], dim + v_extra_dim, dim, qkv_bias)
    wp_t, bp = linear(keys[6], keys[7], dim, out_dim, True)
    return {"wq_t": wq_t, "bq": bq, "wk_t": wk_t, "bk": bk,
            "wv_t": wv_t, "bv": bv, "wproj_t": wp_t, "bproj": bp}


def _reference(query, key, value, params, num_heads, att_bias=None, attn_act="softmax"):
    """Pure-JAX reference mirroring the PyTorch FullAttnModule.forward (eval mode)."""
    dim = params["wq_t"].shape[1]
    hd = dim // num_heads
    scale = float(hd) ** (-0.5)
    B, nq, _ = query.shape

    q = query @ params["wq_t"] + params["bq"]
    k = key @ params["wk_t"] + params["bk"]
    v = value @ params["wv_t"] + params["bv"]

    def split(x):
        b, n, _ = x.shape
        return x.reshape(b, n, num_heads, hd).transpose(0, 2, 1, 3)

    q, k, v = split(q), split(k), split(v)
    attn = jnp.einsum("bhqd,bhkd->bhqk", q, k) * scale
    if att_bias is not None:
        attn = attn + att_bias[:, None]
    if attn_act == "softmax":
        attn = jax.nn.softmax(attn, axis=-1)
    elif attn_act == "sigmoid":
        attn = jax.nn.sigmoid(attn)
    out = jnp.einsum("bhqk,bhkd->bhqd", attn, v)
    out = out.transpose(0, 2, 1, 3).reshape(B, nq, dim)
    return out @ params["wproj_t"] + params["bproj"]


if __name__ == "__main__":
    B, Nq, Nk, DIM, HEADS = 2, 8, 8, 32, 4
    root = jax.random.PRNGKey(0)
    kq, kk, kv, kb, kp = jax.random.split(root, 5)

    query = jax.random.normal(kq, (B, Nq, DIM), jnp.float32)
    key = jax.random.normal(kk, (B, Nk, DIM), jnp.float32)
    value = jax.random.normal(kv, (B, Nk, DIM), jnp.float32)
    att_bias = 0.1 * jax.random.normal(kb, (B, Nq, Nk), jnp.float32)
    params = init_params(kp, DIM, HEADS)

    # f32 path, softmax, with att_bias.
    out = full_attn(query, key, value, params, att_bias,
                    num_heads=HEADS, attn_act="softmax")
    out = jax.block_until_ready(out)
    ref = _reference(query, key, value, params, HEADS, att_bias, "softmax")
    assert out.shape == (B, Nq, DIM), out.shape
    err = float(jnp.max(jnp.abs(out - ref)))
    assert err < 1e-2, err

    # No-bias + sigmoid variant (compile-time specialized: bias input omitted).
    out2 = full_attn(query, key, value, params, None,
                     num_heads=HEADS, attn_act="sigmoid")
    out2 = jax.block_until_ready(out2)
    ref2 = _reference(query, key, value, params, HEADS, None, "sigmoid")
    err2 = float(jnp.max(jnp.abs(out2 - ref2)))
    assert err2 < 1e-2, err2

    # bf16 path: MXU operands in bf16, f32 accumulation inside the kernel.
    qb = query.astype(jnp.bfloat16)
    kb_ = key.astype(jnp.bfloat16)
    vb = value.astype(jnp.bfloat16)
    pb = jax.tree_util.tree_map(lambda a: a.astype(jnp.bfloat16), params)
    out_bf16 = full_attn(qb, kb_, vb, pb, att_bias, num_heads=HEADS)
    out_bf16 = jax.block_until_ready(out_bf16)
    diff_bf16 = float(jnp.max(jnp.abs(out_bf16.astype(jnp.float32) - ref)))
    assert bool(jnp.all(jnp.isfinite(out_bf16.astype(jnp.float32))))
    assert diff_bf16 < 0.25, diff_bf16

    # f32 inputs with in-kernel bf16 MXU operands (f32 accumulation + f32 epilogue).
    out_mxu = full_attn(query, key, value, params, att_bias,
                        num_heads=HEADS, mxu_dtype="bfloat16")
    out_mxu = jax.block_until_ready(out_mxu)
    diff_mxu = float(jnp.max(jnp.abs(out_mxu - ref)))
    assert diff_mxu < 0.25, diff_mxu

    print("KERNEL_OK")
</pallas_src>

<mosaic_0001>
module attributes {stable_mosaic.version = 11 : i64} {
  func.func @kernel(%arg0: i32, %arg1: memref<1x8x32xf32, #tpu.memory_space<vmem>>, %arg2: memref<1x8x32xf32, #tpu.memory_space<vmem>>, %arg3: memref<1x8x32xf32, #tpu.memory_space<vmem>>, %arg4: memref<1x8x8xf32, #tpu.memory_space<vmem>>, %arg5: memref<32x32xf32, #tpu.memory_space<vmem>>, %arg6: memref<1x32xf32, #tpu.memory_space<vmem>>, %arg7: memref<32x32xf32, #tpu.memory_space<vmem>>, %arg8: memref<1x32xf32, #tpu.memory_space<vmem>>, %arg9: memref<32x32xf32, #tpu.memory_space<vmem>>, %arg10: memref<1x32xf32, #tpu.memory_space<vmem>>, %arg11: memref<32x32xf32, #tpu.memory_space<vmem>>, %arg12: memref<1x32xf32, #tpu.memory_space<vmem>>, %arg13: memref<1x8x32xf32, #tpu.memory_space<vmem>>) attributes {dimension_semantics = [#tpu.dimension_semantics<parallel>], iteration_bounds = array<i64: 2>, scalar_prefetch = 0 : i64, scratch_operands = 0 : i64, tpu.core_type = #tpu.core_type<tc>, window_params = [{transform_indices = @transform_0, window_bounds = array<i64: 1, 8, 32>}, {transform_indices = @transform_1, window_bounds = array<i64: 1, 8, 32>}, {transform_indices = @transform_2, window_bounds = array<i64: 1, 8, 32>}, {transform_indices = @transform_3, window_bounds = array<i64: 1, 8, 8>}, {pipeline_mode = #tpu.pipeline_mode<synchronous>, transform_indices = @transform_4, window_bounds = array<i64: 32, 32>}, {pipeline_mode = #tpu.pipeline_mode<synchronous>, transform_indices = @transform_5, window_bounds = array<i64: 1, 32>}, {pipeline_mode = #tpu.pipeline_mode<synchronous>, transform_indices = @transform_6, window_bounds = array<i64: 32, 32>}, {pipeline_mode = #tpu.pipeline_mode<synchronous>, transform_indices = @transform_7, window_bounds = array<i64: 1, 32>}, {pipeline_mode = #tpu.pipeline_mode<synchronous>, transform_indices = @transform_8, window_bounds = array<i64: 32, 32>}, {pipeline_mode = #tpu.pipeline_mode<synchronous>, transform_indices = @transform_9, window_bounds = array<i64: 1, 32>}, {pipeline_mode = #tpu.pipeline_mode<synchronous>, transform_indices = @transform_10, window_bounds = array<i64: 32, 32>}, {pipeline_mode = #tpu.pipeline_mode<synchronous>, transform_indices = @transform_11, window_bounds = array<i64: 1, 32>}, {transform_indices = @transform_12, window_bounds = array<i64: 1, 8, 32>}]} {
    %c0 = arith.constant 0 : index
    %c0_0 = arith.constant 0 : index
    %c0_1 = arith.constant 0 : index
    %0 = vector.load %arg1[%c0, %c0_0, %c0_1] : memref<1x8x32xf32, #tpu.memory_space<vmem>>, vector<1x8x32xf32>
    %1 = vector.shape_cast %0 : vector<1x8x32xf32> to vector<8x32xf32>
    %c0_2 = arith.constant 0 : index
    %c0_3 = arith.constant 0 : index
    %c0_4 = arith.constant 0 : index
    %2 = vector.load %arg2[%c0_2, %c0_3, %c0_4] : memref<1x8x32xf32, #tpu.memory_space<vmem>>, vector<1x8x32xf32>
    %3 = vector.shape_cast %2 : vector<1x8x32xf32> to vector<8x32xf32>
    %c0_5 = arith.constant 0 : index
    %c0_6 = arith.constant 0 : index
    %c0_7 = arith.constant 0 : index
    %4 = vector.load %arg3[%c0_5, %c0_6, %c0_7] : memref<1x8x32xf32, #tpu.memory_space<vmem>>, vector<1x8x32xf32>
    %5 = vector.shape_cast %4 : vector<1x8x32xf32> to vector<8x32xf32>
    %c0_8 = arith.constant 0 : index
    %c0_9 = arith.constant 0 : index
    %6 = vector.load %arg5[%c0_8, %c0_9] : memref<32x32xf32, #tpu.memory_space<vmem>>, vector<32x32xf32>
    %cst = arith.constant dense<0.000000e+00> : vector<8x32xf32>
    %7 = tpu.matmul %1, %6, %cst {dimension_numbers = #tpu.dot_dimension_numbers<[1], [0], [0], [1], [0, 0, 1, 1], [], []>} : vector<8x32xf32>, vector<32x32xf32>, vector<8x32xf32> -> vector<8x32xf32>
    %c0_10 = arith.constant 0 : index
    %c0_11 = arith.constant 0 : index
    %8 = vector.load %arg6[%c0_10, %c0_11] : memref<1x32xf32, #tpu.memory_space<vmem>>, vector<1x32xf32>
    %9 = vector.broadcast %8 : vector<1x32xf32> to vector<8x32xf32>
    %10 = arith.addf %7, %9 : vector<8x32xf32>
    %cst_12 = arith.constant 0.353553385 : f32
    %11 = vector.broadcast %cst_12 : f32 to vector<8x32xf32>
    %12 = arith.mulf %10, %11 : vector<8x32xf32>
    %13 = vector.shape_cast %12 : vector<8x32xf32> to vector<1x8x32xf32>
    %c0_13 = arith.constant 0 : index
    %c0_14 = arith.constant 0 : index
    %14 = vector.load %arg7[%c0_13, %c0_14] : memref<32x32xf32, #tpu.memory_space<vmem>>, vector<32x32xf32>
    %cst_15 = arith.constant dense<0.000000e+00> : vector<8x32xf32>
    %15 = tpu.matmul %3, %14, %cst_15 {dimension_numbers = #tpu.dot_dimension_numbers<[1], [0], [0], [1], [0, 0, 1, 1], [], []>} : vector<8x32xf32>, vector<32x32xf32>, vector<8x32xf32> -> vector<8x32xf32>
    %c0_16 = arith.constant 0 : index
    %c0_17 = arith.constant 0 : index
    %16 = vector.load %arg8[%c0_16, %c0_17] : memref<1x32xf32, #tpu.memory_space<vmem>>, vector<1x32xf32>
    %17 = vector.broadcast %16 : vector<1x32xf32> to vector<8x32xf32>
    %18 = arith.addf %15, %17 : vector<8x32xf32>
    %19 = vector.shape_cast %18 : vector<8x32xf32> to vector<1x8x32xf32>
    %c0_18 = arith.constant 0 : index
    %c0_19 = arith.constant 0 : index
    %20 = vector.load %arg9[%c0_18, %c0_19] : memref<32x32xf32, #tpu.memory_space<vmem>>, vector<32x32xf32>
    %cst_20 = arith.constant dense<0.000000e+00> : vector<8x32xf32>
    %21 = tpu.matmul %5, %20, %cst_20 {dimension_numbers = #tpu.dot_dimension_numbers<[1], [0], [0], [1], [0, 0, 1, 1], [], []>} : vector<8x32xf32>, vector<32x32xf32>, vector<8x32xf32> -> vector<8x32xf32>
    %c0_21 = arith.constant 0 : index
    %c0_22 = arith.constant 0 : index
    %22 = vector.load %arg10[%c0_21, %c0_22] : memref<1x32xf32, #tpu.memory_space<vmem>>, vector<1x32xf32>
    %23 = vector.broadcast %22 : vector<1x32xf32> to vector<8x32xf32>
    %24 = arith.addf %21, %23 : vector<8x32xf32>
    %25 = vector.shape_cast %24 : vector<8x32xf32> to vector<1x8x32xf32>
    %c0_23 = arith.constant 0 : index
    %c0_24 = arith.constant 0 : index
    %c0_25 = arith.constant 0 : index
    %26 = vector.load %arg4[%c0_23, %c0_24, %c0_25] : memref<1x8x8xf32, #tpu.memory_space<vmem>>, vector<1x8x8xf32>
    %c0_26 = arith.constant 0 : index
    %c0_27 = arith.constant 0 : index
    %27 = vector.load %arg11[%c0_26, %c0_27] : memref<32x32xf32, #tpu.memory_space<vmem>>, vector<32x32xf32>
    %c0_28 = arith.constant 0 : index
    %c0_29 = arith.constant 0 : index
    %28 = vector.load %arg12[%c0_28, %c0_29] : memref<1x32xf32, #tpu.memory_space<vmem>>, vector<1x32xf32>
    %29 = vector.shape_cast %28 : vector<1x32xf32> to vector<1x32xf32>
    %30 = vector.broadcast %29 : vector<1x32xf32> to vector<8x32xf32>
    %31 = vector.extract_strided_slice %13 {offsets = [0, 0, 0], sizes = [1, 8, 8], strides = [1, 1, 1]} : vector<1x8x32xf32> to vector<1x8x8xf32>
    %32 = vector.extract_strided_slice %19 {offsets = [0, 0, 0], sizes = [1, 8, 8], strides = [1, 1, 1]} : vector<1x8x32xf32> to vector<1x8x8xf32>
    %33 = vector.extract_strided_slice %25 {offsets = [0, 0, 0], sizes = [1, 8, 8], strides = [1, 1, 1]} : vector<1x8x32xf32> to vector<1x8x8xf32>
    "tpu.trace_start"() <{level = 10 : i32, message = "bqd,bkd->bqk"}> : () -> ()
    %cst_30 = arith.constant dense<0.000000e+00> : vector<1x8x8xf32>
    %34 = tpu.matmul %31, %32, %cst_30 {dimension_numbers = #tpu.dot_dimension_numbers<[2], [2], [1], [1], [0, 0, 0, 1, 1, 1], [0], [0]>} : vector<1x8x8xf32>, vector<1x8x8xf32>, vector<1x8x8xf32> -> vector<1x8x8xf32>
    "tpu.trace_stop"() : () -> ()
    %35 = arith.addf %34, %26 : vector<1x8x8xf32>
    %cst_31 = arith.constant dense<0xFF800000> : vector<1x8xf32>
    %36 = vector.multi_reduction <maximumf>, %35, %cst_31 [2] : vector<1x8x8xf32> to vector<1x8xf32>
    %37 = vector.shape_cast %36 : vector<1x8xf32> to vector<1x8x1xf32>
    %38 = vector.broadcast %37 : vector<1x8x1xf32> to vector<1x8x8xf32>
    %39 = arith.subf %35, %38 : vector<1x8x8xf32>
    %40 = math.exp %39 : vector<1x8x8xf32>
    %cst_32 = arith.constant dense<0.000000e+00> : vector<1x8xf32>
    %41 = vector.multi_reduction <add>, %40, %cst_32 [2] : vector<1x8x8xf32> to vector<1x8xf32>
    %42 = vector.shape_cast %41 : vector<1x8xf32> to vector<1x8x1xf32>
    %43 = tpu.reciprocal %42 {approx = true} : vector<1x8x1xf32> -> vector<1x8x1xf32>
    %44 = vector.broadcast %43 : vector<1x8x1xf32> to vector<1x8x8xf32>
    %45 = arith.mulf %40, %44 : vector<1x8x8xf32>
    "tpu.trace_start"() <{level = 10 : i32, message = "bqk,bkd->bqd"}> : () -> ()
    %cst_33 = arith.constant dense<0.000000e+00> : vector<1x8x8xf32>
    %46 = tpu.matmul %45, %33, %cst_33 {dimension_numbers = #tpu.dot_dimension_numbers<[2], [1], [1], [2], [0, 0, 0, 1, 1, 2], [0], [0]>} : vector<1x8x8xf32>, vector<1x8x8xf32>, vector<1x8x8xf32> -> vector<1x8x8xf32>
    "tpu.trace_stop"() : () -> ()
    %47 = vector.shape_cast %46 : vector<1x8x8xf32> to vector<8x8xf32>
    %48 = vector.extract_strided_slice %27 {offsets = [0, 0], sizes = [8, 32], strides = [1, 1]} : vector<32x32xf32> to vector<8x32xf32>
    %cst_34 = arith.constant dense<0.000000e+00> : vector<8x32xf32>
    %49 = tpu.matmul %47, %48, %cst_34 {dimension_numbers = #tpu.dot_dimension_numbers<[1], [0], [0], [1], [0, 0, 1, 1], [], []>} : vector<8x8xf32>, vector<8x32xf32>, vector<8x32xf32> -> vector<8x32xf32>
    %50 = arith.addf %30, %49 : vector<8x32xf32>
    %51 = vector.extract_strided_slice %13 {offsets = [0, 0, 8], sizes = [1, 8, 8], strides = [1, 1, 1]} : vector<1x8x32xf32> to vector<1x8x8xf32>
    %52 = vector.extract_strided_slice %19 {offsets = [0, 0, 8], sizes = [1, 8, 8], strides = [1, 1, 1]} : vector<1x8x32xf32> to vector<1x8x8xf32>
    %53 = vector.extract_strided_slice %25 {offsets = [0, 0, 8], sizes = [1, 8, 8], strides = [1, 1, 1]} : vector<1x8x32xf32> to vector<1x8x8xf32>
    "tpu.trace_start"() <{level = 10 : i32, message = "bqd,bkd->bqk"}> : () -> ()
    %cst_35 = arith.constant dense<0.000000e+00> : vector<1x8x8xf32>
    %54 = tpu.matmul %51, %52, %cst_35 {dimension_numbers = #tpu.dot_dimension_numbers<[2], [2], [1], [1], [0, 0, 0, 1, 1, 1], [0], [0]>} : vector<1x8x8xf32>, vector<1x8x8xf32>, vector<1x8x8xf32> -> vector<1x8x8xf32>
    "tpu.trace_stop"() : () -> ()
    %55 = arith.addf %54, %26 : vector<1x8x8xf32>
    %cst_36 = arith.constant dense<0xFF800000> : vector<1x8xf32>
    %56 = vector.multi_reduction <maximumf>, %55, %cst_36 [2] : vector<1x8x8xf32> to vector<1x8xf32>
    %57 = vector.shape_cast %56 : vector<1x8xf32> to vector<1x8x1xf32>
    %58 = vector.broadcast %57 : vector<1x8x1xf32> to vector<1x8x8xf32>
    %59 = arith.subf %55, %58 : vector<1x8x8xf32>
    %60 = math.exp %59 : vector<1x8x8xf32>
    %cst_37 = arith.constant dense<0.000000e+00> : vector<1x8xf32>
    %61 = vector.multi_reduction <add>, %60, %cst_37 [2] : vector<1x8x8xf32> to vector<1x8xf32>
    %62 = vector.shape_cast %61 : vector<1x8xf32> to vector<1x8x1xf32>
    %63 = tpu.reciprocal %62 {approx = true} : vector<1x8x1xf32> -> vector<1x8x1xf32>
    %64 = vector.broadcast %63 : vector<1x8x1xf32> to vector<1x8x8xf32>
    %65 = arith.mulf %60, %64 : vector<1x8x8xf32>
    "tpu.trace_start"() <{level = 10 : i32, message = "bqk,bkd->bqd"}> : () -> ()
    %cst_38 = arith.constant dense<0.000000e+00> : vector<1x8x8xf32>
    %66 = tpu.matmul %65, %53, %cst_38 {dimension_numbers = #tpu.dot_dimension_numbers<[2], [1], [1], [2], [0, 0, 0, 1, 1, 2], [0], [0]>} : vector<1x8x8xf32>, vector<1x8x8xf32>, vector<1x8x8xf32> -> vector<1x8x8xf32>
    "tpu.trace_stop"() : () -> ()
    %67 = vector.shape_cast %66 : vector<1x8x8xf32> to vector<8x8xf32>
    %68 = vector.extract_strided_slice %27 {offsets = [8, 0], sizes = [8, 32], strides = [1, 1]} : vector<32x32xf32> to vector<8x32xf32>
    %cst_39 = arith.constant dense<0.000000e+00> : vector<8x32xf32>
    %69 = tpu.matmul %67, %68, %cst_39 {dimension_numbers = #tpu.dot_dimension_numbers<[1], [0], [0], [1], [0, 0, 1, 1], [], []>} : vector<8x8xf32>, vector<8x32xf32>, vector<8x32xf32> -> vector<8x32xf32>
    %70 = arith.addf %50, %69 : vector<8x32xf32>
    %71 = vector.extract_strided_slice %13 {offsets = [0, 0, 16], sizes = [1, 8, 8], strides = [1, 1, 1]} : vector<1x8x32xf32> to vector<1x8x8xf32>
    %72 = vector.extract_strided_slice %19 {offsets = [0, 0, 16], sizes = [1, 8, 8], strides = [1, 1, 1]} : vector<1x8x32xf32> to vector<1x8x8xf32>
    %73 = vector.extract_strided_slice %25 {offsets = [0, 0, 16], sizes = [1, 8, 8], strides = [1, 1, 1]} : vector<1x8x32xf32> to vector<1x8x8xf32>
    "tpu.trace_start"() <{level = 10 : i32, message = "bqd,bkd->bqk"}> : () -> ()
    %cst_40 = arith.constant dense<0.000000e+00> : vector<1x8x8xf32>
    %74 = tpu.matmul %71, %72, %cst_40 {dimension_numbers = #tpu.dot_dimension_numbers<[2], [2], [1], [1], [0, 0, 0, 1, 1, 1], [0], [0]>} : vector<1x8x8xf32>, vector<1x8x8xf32>, vector<1x8x8xf32> -> vector<1x8x8xf32>
    "tpu.trace_stop"() : () -> ()
    %75 = arith.addf %74, %26 : vector<1x8x8xf32>
    %cst_41 = arith.constant dense<0xFF800000> : vector<1x8xf32>
    %76 = vector.multi_reduction <maximumf>, %75, %cst_41 [2] : vector<1x8x8xf32> to vector<1x8xf32>
    %77 = vector.shape_cast %76 : vector<1x8xf32> to vector<1x8x1xf32>
    %78 = vector.broadcast %77 : vector<1x8x1xf32> to vector<1x8x8xf32>
    %79 = arith.subf %75, %78 : vector<1x8x8xf32>
    %80 = math.exp %79 : vector<1x8x8xf32>
    %cst_42 = arith.constant dense<0.000000e+00> : vector<1x8xf32>
    %81 = vector.multi_reduction <add>, %80, %cst_42 [2] : vector<1x8x8xf32> to vector<1x8xf32>
    %82 = vector.shape_cast %81 : vector<1x8xf32> to vector<1x8x1xf32>
    %83 = tpu.reciprocal %82 {approx = true} : vector<1x8x1xf32> -> vector<1x8x1xf32>
    %84 = vector.broadcast %83 : vector<1x8x1xf32> to vector<1x8x8xf32>
    %85 = arith.mulf %80, %84 : vector<1x8x8xf32>
    "tpu.trace_start"() <{level = 10 : i32, message = "bqk,bkd->bqd"}> : () -> ()
    %cst_43 = arith.constant dense<0.000000e+00> : vector<1x8x8xf32>
    %86 = tpu.matmul %85, %73, %cst_43 {dimension_numbers = #tpu.dot_dimension_numbers<[2], [1], [1], [2], [0, 0, 0, 1, 1, 2], [0], [0]>} : vector<1x8x8xf32>, vector<1x8x8xf32>, vector<1x8x8xf32> -> vector<1x8x8xf32>
    "tpu.trace_stop"() : () -> ()
    %87 = vector.shape_cast %86 : vector<1x8x8xf32> to vector<8x8xf32>
    %88 = vector.extract_strided_slice %27 {offsets = [16, 0], sizes = [8, 32], strides = [1, 1]} : vector<32x32xf32> to vector<8x32xf32>
    %cst_44 = arith.constant dense<0.000000e+00> : vector<8x32xf32>
    %89 = tpu.matmul %87, %88, %cst_44 {dimension_numbers = #tpu.dot_dimension_numbers<[1], [0], [0], [1], [0, 0, 1, 1], [], []>} : vector<8x8xf32>, vector<8x32xf32>, vector<8x32xf32> -> vector<8x32xf32>
    %90 = arith.addf %70, %89 : vector<8x32xf32>
    %91 = vector.extract_strided_slice %13 {offsets = [0, 0, 24], sizes = [1, 8, 8], strides = [1, 1, 1]} : vector<1x8x32xf32> to vector<1x8x8xf32>
    %92 = vector.extract_strided_slice %19 {offsets = [0, 0, 24], sizes = [1, 8, 8], strides = [1, 1, 1]} : vector<1x8x32xf32> to vector<1x8x8xf32>
    %93 = vector.extract_strided_slice %25 {offsets = [0, 0, 24], sizes = [1, 8, 8], strides = [1, 1, 1]} : vector<1x8x32xf32> to vector<1x8x8xf32>
    "tpu.trace_start"() <{level = 10 : i32, message = "bqd,bkd->bqk"}> : () -> ()
    %cst_45 = arith.constant dense<0.000000e+00> : vector<1x8x8xf32>
    %94 = tpu.matmul %91, %92, %cst_45 {dimension_numbers = #tpu.dot_dimension_numbers<[2], [2], [1], [1], [0, 0, 0, 1, 1, 1], [0], [0]>} : vector<1x8x8xf32>, vector<1x8x8xf32>, vector<1x8x8xf32> -> vector<1x8x8xf32>
    "tpu.trace_stop"() : () -> ()
    %95 = arith.addf %94, %26 : vector<1x8x8xf32>
    %cst_46 = arith.constant dense<0xFF800000> : vector<1x8xf32>
    %96 = vector.multi_reduction <maximumf>, %95, %cst_46 [2] : vector<1x8x8xf32> to vector<1x8xf32>
    %97 = vector.shape_cast %96 : vector<1x8xf32> to vector<1x8x1xf32>
    %98 = vector.broadcast %97 : vector<1x8x1xf32> to vector<1x8x8xf32>
    %99 = arith.subf %95, %98 : vector<1x8x8xf32>
    %100 = math.exp %99 : vector<1x8x8xf32>
    %cst_47 = arith.constant dense<0.000000e+00> : vector<1x8xf32>
    %101 = vector.multi_reduction <add>, %100, %cst_47 [2] : vector<1x8x8xf32> to vector<1x8xf32>
    %102 = vector.shape_cast %101 : vector<1x8xf32> to vector<1x8x1xf32>
    %103 = tpu.reciprocal %102 {approx = true} : vector<1x8x1xf32> -> vector<1x8x1xf32>
    %104 = vector.broadcast %103 : vector<1x8x1xf32> to vector<1x8x8xf32>
    %105 = arith.mulf %100, %104 : vector<1x8x8xf32>
    "tpu.trace_start"() <{level = 10 : i32, message = "bqk,bkd->bqd"}> : () -> ()
    %cst_48 = arith.constant dense<0.000000e+00> : vector<1x8x8xf32>
    %106 = tpu.matmul %105, %93, %cst_48 {dimension_numbers = #tpu.dot_dimension_numbers<[2], [1], [1], [2], [0, 0, 0, 1, 1, 2], [0], [0]>} : vector<1x8x8xf32>, vector<1x8x8xf32>, vector<1x8x8xf32> -> vector<1x8x8xf32>
    "tpu.trace_stop"() : () -> ()
    %107 = vector.shape_cast %106 : vector<1x8x8xf32> to vector<8x8xf32>
    %108 = vector.extract_strided_slice %27 {offsets = [24, 0], sizes = [8, 32], strides = [1, 1]} : vector<32x32xf32> to vector<8x32xf32>
    %cst_49 = arith.constant dense<0.000000e+00> : vector<8x32xf32>
    %109 = tpu.matmul %107, %108, %cst_49 {dimension_numbers = #tpu.dot_dimension_numbers<[1], [0], [0], [1], [0, 0, 1, 1], [], []>} : vector<8x8xf32>, vector<8x32xf32>, vector<8x32xf32> -> vector<8x32xf32>
    %110 = arith.addf %90, %109 : vector<8x32xf32>
    %111 = vector.shape_cast %110 : vector<8x32xf32> to vector<1x8x32xf32>
    %c0_50 = arith.constant 0 : index
    %c0_51 = arith.constant 0 : index
    %c0_52 = arith.constant 0 : index
    %112 = vector.load %arg13[%c0_50, %c0_51, %c0_52] : memref<1x8x32xf32, #tpu.memory_space<vmem>>, vector<1x8x32xf32>
    tpu.vector_store %arg13[%c0_50, %c0_51, %c0_52], %111 {strides = array<i32>} : memref<1x8x32xf32, #tpu.memory_space<vmem>>, vector<1x8x32xf32>,
    return
  }
  func.func @transform_0(%arg0: i32) -> (i32, i32, i32) {
    %c0_i32 = arith.constant 0 : i32
    %c0_i32_0 = arith.constant 0 : i32
    %c0_i32_1 = arith.constant 0 : i32
    return %arg0, %c0_i32, %c0_i32_0 : i32, i32, i32
  }
  func.func @transform_1(%arg0: i32) -> (i32, i32, i32) {
    %c0_i32 = arith.constant 0 : i32
    %c0_i32_0 = arith.constant 0 : i32
    %c0_i32_1 = arith.constant 0 : i32
    return %arg0, %c0_i32, %c0_i32_0 : i32, i32, i32
  }
  func.func @transform_2(%arg0: i32) -> (i32, i32, i32) {
    %c0_i32 = arith.constant 0 : i32
    %c0_i32_0 = arith.constant 0 : i32
    %c0_i32_1 = arith.constant 0 : i32
    return %arg0, %c0_i32, %c0_i32_0 : i32, i32, i32
  }
  func.func @transform_3(%arg0: i32) -> (i32, i32, i32) {
    %c0_i32 = arith.constant 0 : i32
    %c0_i32_0 = arith.constant 0 : i32
    %c0_i32_1 = arith.constant 0 : i32
    return %arg0, %c0_i32, %c0_i32_0 : i32, i32, i32
  }
  func.func @transform_4(%arg0: i32) -> (i32, i32) {
    %c0_i32 = arith.constant 0 : i32
    %c0_i32_0 = arith.constant 0 : i32
    %c0_i32_1 = arith.constant 0 : i32
    return %c0_i32, %c0_i32_0 : i32, i32
  }
  func.func @transform_5(%arg0: i32) -> (i32, i32) {
    %c0_i32 = arith.constant 0 : i32
    %c0_i32_0 = arith.constant 0 : i32
    %c0_i32_1 = arith.constant 0 : i32
    return %c0_i32, %c0_i32_0 : i32, i32
  }
  func.func @transform_6(%arg0: i32) -> (i32, i32) {
    %c0_i32 = arith.constant 0 : i32
    %c0_i32_0 = arith.constant 0 : i32
    %c0_i32_1 = arith.constant 0 : i32
    return %c0_i32, %c0_i32_0 : i32, i32
  }
  func.func @transform_7(%arg0: i32) -> (i32, i32) {
    %c0_i32 = arith.constant 0 : i32
    %c0_i32_0 = arith.constant 0 : i32
    %c0_i32_1 = arith.constant 0 : i32
    return %c0_i32, %c0_i32_0 : i32, i32
  }
  func.func @transform_8(%arg0: i32) -> (i32, i32) {
    %c0_i32 = arith.constant 0 : i32
    %c0_i32_0 = arith.constant 0 : i32
    %c0_i32_1 = arith.constant 0 : i32
    return %c0_i32, %c0_i32_0 : i32, i32
  }
  func.func @transform_9(%arg0: i32) -> (i32, i32) {
    %c0_i32 = arith.constant 0 : i32
    %c0_i32_0 = arith.constant 0 : i32
    %c0_i32_1 = arith.constant 0 : i32
    return %c0_i32, %c0_i32_0 : i32, i32
  }
  func.func @transform_10(%arg0: i32) -> (i32, i32) {
    %c0_i32 = arith.constant 0 : i32
    %c0_i32_0 = arith.constant 0 : i32
    %c0_i32_1 = arith.constant 0 : i32
    return %c0_i32, %c0_i32_0 : i32, i32
  }
  func.func @transform_11(%arg0: i32) -> (i32, i32) {
    %c0_i32 = arith.constant 0 : i32
    %c0_i32_0 = arith.constant 0 : i32
    %c0_i32_1 = arith.constant 0 : i32
    return %c0_i32, %c0_i32_0 : i32, i32
  }
  func.func @transform_12(%arg0: i32) -> (i32, i32, i32) {
    %c0_i32 = arith.constant 0 : i32
    %c0_i32_0 = arith.constant 0 : i32
    %c0_i32_1 = arith.constant 0 : i32
    return %arg0, %c0_i32, %c0_i32_0 : i32, i32, i32
  }
}

</mosaic_0001>

<llo_original>
// kernel: full_attn.1
$region0: #{full_attn.1}
  #allocation0 [shape = 'u32[]', space=smem, size = 0x4, offset = 0x4, fixed_abs, tag = 'smem constant byte address 0x4 - core index']
  #allocation1 [shape = 'u32[144,128]{1,0:T(1,128)}', space=vmem, size = 0x12000, scoped, tag = 'internal scratch']
  %s0 = inlined_call_operand.hbm [shape: f32[2,8,32], index: 0, kind: input, shape index: {}]
  %s1 = inlined_call_operand.hbm [shape: f32[2,8,32], index: 1, kind: input, shape index: {}]
  %s2 = inlined_call_operand.hbm [shape: f32[2,8,32], index: 2, kind: input, shape index: {}]
  %s3 = inlined_call_operand.vmem [shape: f32[2,8,8], index: 3, kind: input, shape index: {}]
  %s4 = inlined_call_operand.hbm [shape: f32[32,32], index: 4, kind: input, shape index: {}]
  %s5 = inlined_call_operand.vmem [shape: f32[1,32], index: 5, kind: input, shape index: {}]
  %s6 = inlined_call_operand.hbm [shape: f32[32,32], index: 6, kind: input, shape index: {}]
  %s7 = inlined_call_operand.vmem [shape: f32[1,32], index: 7, kind: input, shape index: {}]
  %s8 = inlined_call_operand.hbm [shape: f32[32,32], index: 8, kind: input, shape index: {}]
  %s9 = inlined_call_operand.vmem [shape: f32[1,32], index: 9, kind: input, shape index: {}]
  %s10 = inlined_call_operand.hbm [shape: f32[32,32], index: 10, kind: input, shape index: {}]
  %s11 = inlined_call_operand.vmem [shape: f32[1,32], index: 11, kind: input, shape index: {}]
  %s12 = inlined_call_operand.hbm [shape: f32[2,8,32], index: 12, kind: output, shape index: {}]
  %s13 = sld [smem:[#allocation0]]
  $region109: #{full_attn.1} parent=0
    _
  %s15 = ssub.s32 1, %s13
  %s16 = scalar_select 0, %s15, %s13
  $region1: #{full_attn.1} parent=0
    #allocation2 [shape = 'u8[8192]{0}', space=vmem, size = 0x2000, scoped, tag = 'input window, operand 0']
    #allocation3 [shape = 's32[2]{0}', space=sflag, size = 0x8, scoped, tag = 'scoped memory for full_attn.1']
    #allocation4 [shape = 's32[2]{0}', space=sflag, size = 0x8, scoped, tag = 'scoped memory for full_attn.1']
    #allocation5 [shape = 'u8[8192]{0}', space=vmem, size = 0x2000, scoped, tag = 'input window, operand 1']
    #allocation6 [shape = 's32[2]{0}', space=sflag, size = 0x8, scoped, tag = 'scoped memory for full_attn.1']
    #allocation7 [shape = 'u8[8192]{0}', space=vmem, size = 0x2000, scoped, tag = 'input window, operand 2']
    #allocation8 [shape = 'u8[16384]{0}', space=vmem, size = 0x4000, scoped, tag = 'input window, operand 4, single buffered']
    #allocation9 [shape = 's32[1]{0}', space=sflag, size = 0x4, scoped, tag = 'scoped memory for full_attn.1']
    #allocation10 [shape = 'u8[16384]{0}', space=vmem, size = 0x4000, scoped, tag = 'input window, operand 6, single buffered']
    #allocation11 [shape = 'u8[16384]{0}', space=vmem, size = 0x4000, scoped, tag = 'input window, operand 8, single buffered']
    #allocation12 [shape = 's32[1]{0}', space=sflag, size = 0x4, scoped, tag = 'scoped memory for full_attn.1']
    #allocation13 [shape = 'u8[16384]{0}', space=vmem, size = 0x4000, scoped, tag = 'input window, operand 10, single buffered']
    #allocation14 [shape = 'u8[8192]{0}', space=vmem, size = 0x2000, scoped, tag = 'output window, operand 0']
    %17 = vsyncpa [#allocation3], 0
    %s18 = scalar_lea.sflag [#allocation3], 1
    %19 = vsyncpa %s18, 0
    %20 = vsyncpa [#allocation6], 0
    %s21 = scalar_lea.sflag [#allocation6], 1
    %22 = vsyncpa %s21, 0
    %23 = vsyncpa [#allocation9], 0
    %24 = vsyncpa [#allocation12], 0
    %25 = vsyncpa [#allocation4], 0
    %s26 = scalar_lea.sflag [#allocation4], 1
    %27 = vsyncpa %s26, 0
    loop: start=0, step=1, limit=4
    $region2: #{full_attn.1} parent=1 // loop_pre_header
      _
    $region3: #{full_attn.1} parent=1 // loop_header
      %s29 = sphi 0, %s33
      %p30 = scmp.ge.s32.totalorder %s29, 4
      %s39 = sphi 0, %s41
      %s42 = sphi 0, %s39
      %s43 = sphi 0, %s42
      %s59 = sphi 0, %s43
      %s65 = sphi 0, %s67
      %s68 = sphi 0, %s65
      %s69 = sphi 0, %s68
      %s85 = sphi 0, %s69
      %s91 = sphi 0, %s93
      %s94 = sphi 0, %s91
      %s95 = sphi 0, %s94
      %s111 = sphi 0, %s95
      %s117 = sphi 0, %s119
      %s120 = sphi 0, %s117
      %s121 = sphi 0, %s120
      %s137 = sphi 0, %s121
      %s141 = sphi 0, %s141
      %s143 = sphi 0, %s141
      %s144 = sphi 0, %s143
      %s158 = sphi 0, %s144
      %s162 = sphi 0, %s162
      %s164 = sphi 0, %s162
      %s165 = sphi 0, %s164
      %s179 = sphi 0, %s165
      %s183 = sphi 0, %s183
      %s185 = sphi 0, %s183
      %s186 = sphi 0, %s185
      %s200 = sphi 0, %s186
      %s204 = sphi 0, %s204
      %s206 = sphi 0, %s204
      %s207 = sphi 0, %s206
      %s221 = sphi 0, %s207
      %s225 = sphi 0, %s225
      %s227 = sphi 0, %s225
      %s228 = sphi 0, %s227
      %s242 = sphi 0, %s228
      %s246 = sphi 0, %s246
      %s248 = sphi 0, %s246
      %s249 = sphi 0, %s248
      %s263 = sphi 0, %s249
      %s267 = sphi 0, %s267
      %s269 = sphi 0, %s267
      %s270 = sphi 0, %s269
      %s284 = sphi 0, %s270
      %s288 = sphi 0, %s288
      %s290 = sphi 0, %s288
      %s291 = sphi 0, %s290
      %s305 = sphi 0, %s291
      %s311 = sphi 0, %s313
      %s314 = sphi 0, %s311
      %s315 = sphi 0, %s314
      %s331 = sphi 0, %s315
    $region4: #{full_attn.1} parent=1 // loop_header_branch
      %32 = sbr.rel (%p30) target = $region8
    $region5: #{full_attn.1} parent=1 // loop_body
      %s34 = ssub.s32 %s29, 1
      %s35 = ssub.s32 %s29, 2
      %s36 = sadd.s32 %s29, 1
      %s37 = ssub.s32 %s29, %s36
      %p38 = scmp.eq.s32.totalorder %s37, 0
      %s40 = sadd.s32 %s39, 1
      %s41 = scalar_select %p38, %s39, %s40
      %p44 = pneg %p38
      %p45 = scmp.eq.s32.totalorder %s29, 1
      %p46 = por %p44, %p45
      %p47 = scmp.ne.s32.totalorder %s39, %s42
      %p48 = scmp.eq.s32.totalorder %s29, 0
      %p49 = por %p47, %p48
      %p50 = scmp.ne.s32.totalorder %s39, %s42
      %p51 = scmp.eq.s32.totalorder %s34, 1
      %p52 = por %p50, %p51
      %p53 = scmp.ne.s32.totalorder %s42, %s43
      %p54 = scmp.eq.s32.totalorder %s34, 0
      %p55 = por %p53, %p54
      %p56 = scmp.ne.s32.totalorder %s42, %s43
      %p57 = scmp.eq.s32.totalorder %s35, 1
      %p58 = por %p56, %p57
      %p60 = scmp.ne.s32.totalorder %s43, %s59
      %p61 = scmp.eq.s32.totalorder %s35, 0
      %p62 = por %p60, %p61
      %s63 = ssub.s32 %s29, %s36
      %p64 = scmp.eq.s32.totalorder %s63, 0
      %s66 = sadd.s32 %s65, 1
      %s67 = scalar_select %p64, %s65, %s66
      %p70 = pneg %p64
      %p71 = scmp.eq.s32.totalorder %s29, 1
      %p72 = por %p70, %p71
      %p73 = scmp.ne.s32.totalorder %s65, %s68
      %p74 = scmp.eq.s32.totalorder %s29, 0
      %p75 = por %p73, %p74
      %p76 = scmp.ne.s32.totalorder %s65, %s68
      %p77 = scmp.eq.s32.totalorder %s34, 1
      %p78 = por %p76, %p77
      %p79 = scmp.ne.s32.totalorder %s68, %s69
      %p80 = scmp.eq.s32.totalorder %s34, 0
      %p81 = por %p79, %p80
      %p82 = scmp.ne.s32.totalorder %s68, %s69
      %p83 = scmp.eq.s32.totalorder %s35, 1
      %p84 = por %p82, %p83
      %p86 = scmp.ne.s32.totalorder %s69, %s85
      %p87 = scmp.eq.s32.totalorder %s35, 0
      %p88 = por %p86, %p87
      %s89 = ssub.s32 %s29, %s36
      %p90 = scmp.eq.s32.totalorder %s89, 0
      %s92 = sadd.s32 %s91, 1
      %s93 = scalar_select %p90, %s91, %s92
      %p96 = pneg %p90
      %p97 = scmp.eq.s32.totalorder %s29, 1
      %p98 = por %p96, %p97
      %p99 = scmp.ne.s32.totalorder %s91, %s94
      %p100 = scmp.eq.s32.totalorder %s29, 0
      %p101 = por %p99, %p100
      %p102 = scmp.ne.s32.totalorder %s91, %s94
      %p103 = scmp.eq.s32.totalorder %s34, 1
      %p104 = por %p102, %p103
      %p105 = scmp.ne.s32.totalorder %s94, %s95
      %p106 = scmp.eq.s32.totalorder %s34, 0
      %p107 = por %p105, %p106
      %p108 = scmp.ne.s32.totalorder %s94, %s95
      %p109 = scmp.eq.s32.totalorder %s35, 1
      %p110 = por %p108, %p109
      %p112 = scmp.ne.s32.totalorder %s95, %s111
      %p113 = scmp.eq.s32.totalorder %s35, 0
      %p114 = por %p112, %p113
      %s115 = ssub.s32 %s29, %s36
      %p116 = scmp.eq.s32.totalorder %s115, 0
      %s118 = sadd.s32 %s117, 1
      %s119 = scalar_select %p116, %s117, %s118
      %p122 = pneg %p116
      %p123 = scmp.eq.s32.totalorder %s29, 1
      %p124 = por %p122, %p123
      %p125 = scmp.ne.s32.totalorder %s117, %s120
      %p126 = scmp.eq.s32.totalorder %s29, 0
      %p127 = por %p125, %p126
      %p128 = scmp.ne.s32.totalorder %s117, %s120
      %p129 = scmp.eq.s32.totalorder %s34, 1
      %p130 = por %p128, %p129
      %p131 = scmp.ne.s32.totalorder %s120, %s121
      %p132 = scmp.eq.s32.totalorder %s34, 0
      %p133 = por %p131, %p132
      %p134 = scmp.ne.s32.totalorder %s120, %s121
      %p135 = scmp.eq.s32.totalorder %s35, 1
      %p136 = por %p134, %p135
      %p138 = scmp.ne.s32.totalorder %s121, %s137
      %p139 = scmp.eq.s32.totalorder %s35, 0
      %p140 = por %p138, %p139
      %s142 = sadd.s32 %s141, 1
      %p145 = scmp.eq.s32.totalorder %s29, 1
      %p146 = scmp.ne.s32.totalorder %s141, %s143
      %p147 = scmp.eq.s32.totalorder %s29, 0
      %p148 = por %p146, %p147
      %p149 = scmp.ne.s32.totalorder %s141, %s143
      %p150 = scmp.eq.s32.totalorder %s34, 1
      %p151 = por %p149, %p150
      %p152 = scmp.ne.s32.totalorder %s143, %s144
      %p153 = scmp.eq.s32.totalorder %s34, 0
      %p154 = por %p152, %p153
      %p155 = scmp.ne.s32.totalorder %s143, %s144
      %p156 = scmp.eq.s32.totalorder %s35, 1
      %p157 = por %p155, %p156
      %p159 = scmp.ne.s32.totalorder %s144, %s158
      %p160 = scmp.eq.s32.totalorder %s35, 0
      %p161 = por %p159, %p160
      %s163 = sadd.s32 %s162, 1
      %p166 = scmp.eq.s32.totalorder %s29, 1
      %p167 = scmp.ne.s32.totalorder %s162, %s164
      %p168 = scmp.eq.s32.totalorder %s29, 0
      %p169 = por %p167, %p168
      %p170 = scmp.ne.s32.totalorder %s162, %s164
      %p171 = scmp.eq.s32.totalorder %s34, 1
      %p172 = por %p170, %p171
      %p173 = scmp.ne.s32.totalorder %s164, %s165
      %p174 = scmp.eq.s32.totalorder %s34, 0
      %p175 = por %p173, %p174
      %p176 = scmp.ne.s32.totalorder %s164, %s165
      %p177 = scmp.eq.s32.totalorder %s35, 1
      %p178 = por %p176, %p177
      %p180 = scmp.ne.s32.totalorder %s165, %s179
      %p181 = scmp.eq.s32.totalorder %s35, 0
      %p182 = por %p180, %p181
      %s184 = sadd.s32 %s183, 1
      %p187 = scmp.eq.s32.totalorder %s29, 1
      %p188 = scmp.ne.s32.totalorder %s183, %s185
      %p189 = scmp.eq.s32.totalorder %s29, 0
      %p190 = por %p188, %p189
      %p191 = scmp.ne.s32.totalorder %s183, %s185
      %p192 = scmp.eq.s32.totalorder %s34, 1
      %p193 = por %p191, %p192
      %p194 = scmp.ne.s32.totalorder %s185, %s186
      %p195 = scmp.eq.s32.totalorder %s34, 0
      %p196 = por %p194, %p195
      %p197 = scmp.ne.s32.totalorder %s185, %s186
      %p198 = scmp.eq.s32.totalorder %s35, 1
      %p199 = por %p197, %p198
      %p201 = scmp.ne.s32.totalorder %s186, %s200
      %p202 = scmp.eq.s32.totalorder %s35, 0
      %p203 = por %p201, %p202
      %s205 = sadd.s32 %s204, 1
      %p208 = scmp.eq.s32.totalorder %s29, 1
      %p209 = scmp.ne.s32.totalorder %s204, %s206
      %p210 = scmp.eq.s32.totalorder %s29, 0
      %p211 = por %p209, %p210
      %p212 = scmp.ne.s32.totalorder %s204, %s206
      %p213 = scmp.eq.s32.totalorder %s34, 1
      %p214 = por %p212, %p213
      %p215 = scmp.ne.s32.totalorder %s206, %s207
      %p216 = scmp.eq.s32.totalorder %s34, 0
      %p217 = por %p215, %p216
      %p218 = scmp.ne.s32.totalorder %s206, %s207
      %p219 = scmp.eq.s32.totalorder %s35, 1
      %p220 = por %p218, %p219
      %p222 = scmp.ne.s32.totalorder %s207, %s221
      %p223 = scmp.eq.s32.totalorder %s35, 0
      %p224 = por %p222, %p223
      %s226 = sadd.s32 %s225, 1
      %p229 = scmp.eq.s32.totalorder %s29, 1
      %p230 = scmp.ne.s32.totalorder %s225, %s227
      %p231 = scmp.eq.s32.totalorder %s29, 0
      %p232 = por %p230, %p231
      %p233 = scmp.ne.s32.totalorder %s225, %s227
      %p234 = scmp.eq.s32.totalorder %s34, 1
      %p235 = por %p233, %p234
      %p236 = scmp.ne.s32.totalorder %s227, %s228
      %p237 = scmp.eq.s32.totalorder %s34, 0
      %p238 = por %p236, %p237
      %p239 = scmp.ne.s32.totalorder %s227, %s228
      %p240 = scmp.eq.s32.totalorder %s35, 1
      %p241 = por %p239, %p240
      %p243 = scmp.ne.s32.totalorder %s228, %s242
      %p244 = scmp.eq.s32.totalorder %s35, 0
      %p245 = por %p243, %p244
      %s247 = sadd.s32 %s246, 1
      %p250 = scmp.eq.s32.totalorder %s29, 1
      %p251 = scmp.ne.s32.totalorder %s246, %s248
      %p252 = scmp.eq.s32.totalorder %s29, 0
      %p253 = por %p251, %p252
      %p254 = scmp.ne.s32.totalorder %s246, %s248
      %p255 = scmp.eq.s32.totalorder %s34, 1
      %p256 = por %p254, %p255
      %p257 = scmp.ne.s32.totalorder %s248, %s249
      %p258 = scmp.eq.s32.totalorder %s34, 0
      %p259 = por %p257, %p258
      %p260 = scmp.ne.s32.totalorder %s248, %s249
      %p261 = scmp.eq.s32.totalorder %s35, 1
      %p262 = por %p260, %p261
      %p264 = scmp.ne.s32.totalorder %s249, %s263
      %p265 = scmp.eq.s32.totalorder %s35, 0
      %p266 = por %p264, %p265
      %s268 = sadd.s32 %s267, 1
      %p271 = scmp.eq.s32.totalorder %s29, 1
      %p272 = scmp.ne.s32.totalorder %s267, %s269
      %p273 = scmp.eq.s32.totalorder %s29, 0
      %p274 = por %p272, %p273
      %p275 = scmp.ne.s32.totalorder %s267, %s269
      %p276 = scmp.eq.s32.totalorder %s34, 1
      %p277 = por %p275, %p276
      %p278 = scmp.ne.s32.totalorder %s269, %s270
      %p279 = scmp.eq.s32.totalorder %s34, 0
      %p280 = por %p278, %p279
      %p281 = scmp.ne.s32.totalorder %s269, %s270
      %p282 = scmp.eq.s32.totalorder %s35, 1
      %p283 = por %p281, %p282
      %p285 = scmp.ne.s32.totalorder %s270, %s284
      %p286 = scmp.eq.s32.totalorder %s35, 0
      %p287 = por %p285, %p286
      %s289 = sadd.s32 %s288, 1
      %p292 = scmp.eq.s32.totalorder %s29, 1
      %p293 = scmp.ne.s32.totalorder %s288, %s290
      %p294 = scmp.eq.s32.totalorder %s29, 0
      %p295 = por %p293, %p294
      %p296 = scmp.ne.s32.totalorder %s288, %s290
      %p297 = scmp.eq.s32.totalorder %s34, 1
      %p298 = por %p296, %p297
      %p299 = scmp.ne.s32.totalorder %s290, %s291
      %p300 = scmp.eq.s32.totalorder %s34, 0
      %p301 = por %p299, %p300
      %p302 = scmp.ne.s32.totalorder %s290, %s291
      %p303 = scmp.eq.s32.totalorder %s35, 1
      %p304 = por %p302, %p303
      %p306 = scmp.ne.s32.totalorder %s291, %s305
      %p307 = scmp.eq.s32.totalorder %s35, 0
      %p308 = por %p306, %p307
      %s309 = ssub.s32 %s29, %s36
      %p310 = scmp.eq.s32.totalorder %s309, 0
      %s312 = sadd.s32 %s311, 1
      %s313 = scalar_select %p310, %s311, %s312
      %p316 = pneg %p310
      %p317 = scmp.eq.s32.totalorder %s29, 1
      %p318 = por %p316, %p317
      %p319 = scmp.ne.s32.totalorder %s311, %s314
      %p320 = scmp.eq.s32.totalorder %s29, 0
      %p321 = por %p319, %p320
      %p322 = scmp.ne.s32.totalorder %s311, %s314
      %p323 = scmp.eq.s32.totalorder %s34, 1
      %p324 = por %p322, %p323
      %p325 = scmp.ne.s32.totalorder %s314, %s315
      %p326 = scmp.eq.s32.totalorder %s34, 0
      %p327 = por %p325, %p326
      %p328 = scmp.ne.s32.totalorder %s314, %s315
      %p329 = scmp.eq.s32.totalorder %s35, 1
      %p330 = por %p328, %p329
      %p332 = scmp.ne.s32.totalorder %s315, %s331
      %p333 = scmp.eq.s32.totalorder %s35, 0
      %p334 = por %p332, %p333
      %p335 = scmp.le.s32.totalorder 1, %s29
      %p336 = scmp.lt.s32.totalorder %s29, 3
      %p337 = pnand %p335, %p336
      %p338 = pneg %p337
      // Predicated region
      $region9: #{full_attn.1} parent=5 // pred_check
        _
      $region10: #{full_attn.1} parent=5 // pred_check_branch
        %340 = sbr.rel (%p337) target = $region12
      $region11: #{full_attn.1} parent=5 // pred_region
        %s341 = ssub.s32 %s29, 1
        // Predicated region
        $region13: #{full_attn.1} parent=11 // pred_check
          %p342 = pneg %p154
        $region14: #{full_attn.1} parent=11 // pred_check_branch
          %344 = sbr.rel (%p342) target = $region16
        $region15: #{full_attn.1} parent=11 // pred_region
          %s346 = ssub.s32 512, 512
          %347 = vsyncadd [#allocation9], %s346
          %s348 = sshll.u32 [#allocation8], 4
          %s349 = int_to_ptr.vmem [resolvable:$true] %s348
          %354 = dma.hbm_to_vmem [thread:$0]  %s4, 512, %s349, [#allocation9], 128, 128, 8
        $region16: #{full_attn.1} parent=11 // pred_fallthru
          _
        // Predicated region
        $region17: #{full_attn.1} parent=11 // pred_check
          %p355 = pneg %p175
        $region18: #{full_attn.1} parent=11 // pred_check_branch
          %357 = sbr.rel (%p355) target = $region20
        $region19: #{full_attn.1} parent=11 // pred_region
          _
        $region20: #{full_attn.1} parent=11 // pred_fallthru
          _
        // Predicated region
        $region21: #{full_attn.1} parent=11 // pred_check
          %p358 = pneg %p196
        $region22: #{full_attn.1} parent=11 // pred_check_branch
          %360 = sbr.rel (%p358) target = $region24
        $region23: #{full_attn.1} parent=11 // pred_region
          %s362 = ssub.s32 512, 512
          %363 = vsyncadd [#allocation9], %s362
          %s364 = sshll.u32 [#allocation10], 4
          %s365 = int_to_ptr.vmem [resolvable:$true] %s364
          %370 = dma.hbm_to_vmem [thread:$0]  %s6, 512, %s365, [#allocation9], 128, 128, 8
        $region24: #{full_attn.1} parent=11 // pred_fallthru
          _
        // Predicated region
        $region25: #{full_attn.1} parent=11 // pred_check
          %p371 = pneg %p217
        $region26: #{full_attn.1} parent=11 // pred_check_branch
          %373 = sbr.rel (%p371) target = $region28
        $region27: #{full_attn.1} parent=11 // pred_region
          _
        $region28: #{full_attn.1} parent=11 // pred_fallthru
          _
        // Predicated region
        $region29: #{full_attn.1} parent=11 // pred_check
          %p374 = pneg %p238
        $region30: #{full_attn.1} parent=11 // pred_check_branch
          %376 = sbr.rel (%p374) target = $region32
        $region31: #{full_attn.1} parent=11 // pred_region
          %s378 = ssub.s32 512, 512
          %379 = vsyncadd [#allocation12], %s378
          %s380 = sshll.u32 [#allocation11], 4
          %s381 = int_to_ptr.vmem [resolvable:$true] %s380
          %386 = dma.hbm_to_vmem [thread:$0]  %s8, 512, %s381, [#allocation12], 128, 128, 8
        $region32: #{full_attn.1} parent=11 // pred_fallthru
          _
        // Predicated region
        $region33: #{full_attn.1} parent=11 // pred_check
          %p387 = pneg %p259
        $region34: #{full_attn.1} parent=11 // pred_check_branch
          %389 = sbr.rel (%p387) target = $region36
        $region35: #{full_attn.1} parent=11 // pred_region
          _
        $region36: #{full_attn.1} parent=11 // pred_fallthru
          _
        // Predicated region
        $region37: #{full_attn.1} parent=11 // pred_check
          %p390 = pneg %p280
        $region38: #{full_attn.1} parent=11 // pred_check_branch
          %392 = sbr.rel (%p390) target = $region40
        $region39: #{full_attn.1} parent=11 // pred_region
          %s394 = ssub.s32 512, 512
          %395 = vsyncadd [#allocation12], %s394
          %s396 = sshll.u32 [#allocation13], 4
          %s397 = int_to_ptr.vmem [resolvable:$true] %s396
          %402 = dma.hbm_to_vmem [thread:$0]  %s10, 512, %s397, [#allocation12], 128, 128, 8
        $region40: #{full_attn.1} parent=11 // pred_fallthru
          _
        // Predicated region
        $region41: #{full_attn.1} parent=11 // pred_check
          %p403 = pneg %p301
        $region42: #{full_attn.1} parent=11 // pred_check_branch
          %405 = sbr.rel (%p403) target = $region44
        $region43: #{full_attn.1} parent=11 // pred_region
          _
        $region44: #{full_attn.1} parent=11 // pred_fallthru
          _
      $region12: #{full_attn.1} parent=5 // pred_fallthru
        _
      %p406 = scmp.lt.s32.totalorder %s29, 2
      // Predicated region
      $region45: #{full_attn.1} parent=5 // pred_check
        %p407 = pneg %p406
      $region46: #{full_attn.1} parent=5 // pred_check_branch
        %409 = sbr.rel (%p407) target = $region48
      $region47: #{full_attn.1} parent=5 // pred_region
        // Predicated region
        $region49: #{full_attn.1} parent=47 // pred_check
          %p410 = pneg %p49
        $region50: #{full_attn.1} parent=47 // pred_check_branch
          %412 = sbr.rel (%p410) target = $region52
        $region51: #{full_attn.1} parent=47 // pred_region
          %s413 = sand.u32 %s39, 1
          %s414 = scalar_lea.sflag [#allocation3], %s413
          %s415 = sand.u32 %s39, 1
          %s416 = smul.addr %s415, 8
          %s417 = scalar_lea.vmem [#allocation2], %s416
          %s419 = ssub.s32 128, 128
          %420 = vsyncadd %s414, %s419
          %s421 = smul.addr %s29, 128
          %s422 = scalar_lea.hbm %s0, %s421
          %s424 = sshll.u32 %s417, 4
          %s425 = int_to_ptr.vmem [resolvable:$true] %s424
          %427 = dma.hbm_to_vmem [thread:$0]  %s422, 128, %s425, %s414
        $region52: #{full_attn.1} parent=47 // pred_fallthru
          _
        // Predicated region
        $region53: #{full_attn.1} parent=47 // pred_check
          %p428 = pneg %p75
        $region54: #{full_attn.1} parent=47 // pred_check_branch
          %430 = sbr.rel (%p428) target = $region56
        $region55: #{full_attn.1} parent=47 // pred_region
          %s431 = sand.u32 %s29, 1
          %s432 = scalar_lea.sflag [#allocation6], %s431
          %s433 = sand.u32 %s65, 1
          %s434 = smul.addr %s433, 8
          %s435 = scalar_lea.vmem [#allocation5], %s434
          %s437 = ssub.s32 128, 128
          %438 = vsyncadd %s432, %s437
          %s439 = smul.addr %s29, 128
          %s440 = scalar_lea.hbm %s1, %s439
          %s442 = sshll.u32 %s435, 4
          %s443 = int_to_ptr.vmem [resolvable:$true] %s442
          %445 = dma.hbm_to_vmem [thread:$0]  %s440, 128, %s443, %s432
        $region56: #{full_attn.1} parent=47 // pred_fallthru
          _
        // Predicated region
        $region57: #{full_attn.1} parent=47 // pred_check
          %p446 = pneg %p101
        $region58: #{full_attn.1} parent=47 // pred_check_branch
          %448 = sbr.rel (%p446) target = $region60
        $region59: #{full_attn.1} parent=47 // pred_region
          %s449 = sand.u32 %s29, 1
          %s450 = scalar_lea.sflag [#allocation6], %s449
          %s451 = sand.u32 %s91, 1
          %s452 = smul.addr %s451, 8
          %s453 = scalar_lea.vmem [#allocation7], %s452
          %s455 = ssub.s32 128, 128
          %456 = vsyncadd %s450, %s455
          %s457 = smul.addr %s29, 128
          %s458 = scalar_lea.hbm %s2, %s457
          %s460 = sshll.u32 %s453, 4
          %s461 = int_to_ptr.vmem [resolvable:$true] %s460
          %463 = dma.hbm_to_vmem [thread:$0]  %s458, 128, %s461, %s450
        $region60: #{full_attn.1} parent=47 // pred_fallthru
          _
        // Predicated region
        $region61: #{full_attn.1} parent=47 // pred_check
          %p464 = pneg %p127
        $region62: #{full_attn.1} parent=47 // pred_check_branch
          %466 = sbr.rel (%p464) target = $region64
        $region63: #{full_attn.1} parent=47 // pred_region
          %p467 = scmp.lt.s32.totalorder %s29, 1
          %s468 = scalar_select %p467, %s29, 1
          %s469 = smul.addr %s468, 8
          %s470 = scalar_lea.vmem %s3, %s469
        $region64: #{full_attn.1} parent=47 // pred_fallthru
          _
      $region48: #{full_attn.1} parent=5 // pred_fallthru
        _
      %p471 = scmp.le.s32.totalorder 1, %s29
      %p472 = scmp.lt.s32.totalorder %s29, 3
      %p473 = pnand %p471, %p472
      %p474 = pneg %p473
      // Predicated region
      $region65: #{full_attn.1} parent=5 // pred_check
        _
      $region66: #{full_attn.1} parent=5 // pred_check_branch
        %476 = sbr.rel (%p473) target = $region68
      $region67: #{full_attn.1} parent=5 // pred_region
        %s477 = ssub.s32 %s29, 1
        %s478 = sand.u32 %s42, 1
        %s479 = scalar_lea.sflag [#allocation3], %s478
        %s480 = sand.u32 %s42, 1
        %s481 = smul.addr %s480, 8
        %s482 = scalar_lea.vmem [#allocation2], %s481
        // Predicated region
        $region69: #{full_attn.1} parent=67 // pred_check
          %p483 = pneg %p55
        $region70: #{full_attn.1} parent=67 // pred_check_branch
          %485 = sbr.rel (%p483) target = $region72
        $region71: #{full_attn.1} parent=67 // pred_region
          %486 = dma.done %s479, 128
        $region72: #{full_attn.1} parent=67 // pred_fallthru
          _
        %s487 = sand.u32 %s34, 1
        %s488 = scalar_lea.sflag [#allocation6], %s487
        %s489 = sand.u32 %s68, 1
        %s490 = smul.addr %s489, 8
        %s491 = scalar_lea.vmem [#allocation5], %s490
        // Predicated region
        $region73: #{full_attn.1} parent=67 // pred_check
          %p492 = pneg %p81
        $region74: #{full_attn.1} parent=67 // pred_check_branch
          %494 = sbr.rel (%p492) target = $region76
        $region75: #{full_attn.1} parent=67 // pred_region
          %495 = dma.done %s488, 128
        $region76: #{full_attn.1} parent=67 // pred_fallthru
          _
        %s496 = sand.u32 %s34, 1
        %s497 = scalar_lea.sflag [#allocation6], %s496
        %s498 = sand.u32 %s94, 1
        %s499 = smul.addr %s498, 8
        %s500 = scalar_lea.vmem [#allocation7], %s499
        // Predicated region
        $region77: #{full_attn.1} parent=67 // pred_check
          %p501 = pneg %p107
        $region78: #{full_attn.1} parent=67 // pred_check_branch
          %503 = sbr.rel (%p501) target = $region80
        $region79: #{full_attn.1} parent=67 // pred_region
          %504 = dma.done %s497, 128
        $region80: #{full_attn.1} parent=67 // pred_fallthru
          _
        // Predicated region
        $region81: #{full_attn.1} parent=67 // pred_check
          %p505 = pneg %p154
        $region82: #{full_attn.1} parent=67 // pred_check_branch
          %507 = sbr.rel (%p505) target = $region84
        $region83: #{full_attn.1} parent=67 // pred_region
          %508 = dma.done [#allocation9], 512
        $region84: #{full_attn.1} parent=67 // pred_fallthru
          _
        // Predicated region
        $region85: #{full_attn.1} parent=67 // pred_check
          %p509 = pneg %p196
        $region86: #{full_attn.1} parent=67 // pred_check_branch
          %511 = sbr.rel (%p509) target = $region88
        $region87: #{full_attn.1} parent=67 // pred_region
          %512 = dma.done [#allocation9], 512
        $region88: #{full_attn.1} parent=67 // pred_fallthru
          _
        // Predicated region
        $region89: #{full_attn.1} parent=67 // pred_check
          %p513 = pneg %p238
        $region90: #{full_attn.1} parent=67 // pred_check_branch
          %515 = sbr.rel (%p513) target = $region92
        $region91: #{full_attn.1} parent=67 // pred_region
          %516 = dma.done [#allocation12], 512
        $region92: #{full_attn.1} parent=67 // pred_fallthru
          _
        // Predicated region
        $region93: #{full_attn.1} parent=67 // pred_check
          %p517 = pneg %p280
        $region94: #{full_attn.1} parent=67 // pred_check_branch
          %519 = sbr.rel (%p517) target = $region96
        $region95: #{full_attn.1} parent=67 // pred_region
          %520 = dma.done [#allocation12], 512
        $region96: #{full_attn.1} parent=67 // pred_fallthru
          _
        %s521 = sand.u32 %s42, 1
        %s522 = scalar_lea.sflag [#allocation3], %s521
        %s523 = sand.u32 %s42, 1
        %s524 = smul.addr %s523, 8
        %s525 = scalar_lea.vmem [#allocation2], %s524
        %p526 = pneg %p55
        %p527 = pneg %p52
        %s528 = sand.u32 %s34, 1
        %s529 = scalar_lea.sflag [#allocation6], %s528
        %s530 = sand.u32 %s68, 1
        %s531 = smul.addr %s530, 8
        %s532 = scalar_lea.vmem [#allocation5], %s531
        %p533 = pneg %p81
        %p534 = pneg %p78
        %s535 = sand.u32 %s34, 1
        %s536 = scalar_lea.sflag [#allocation6], %s535
        %s537 = sand.u32 %s94, 1
        %s538 = smul.addr %s537, 8
        %s539 = scalar_lea.vmem [#allocation7], %s538
        %p540 = pneg %p107
        %p541 = pneg %p104
        %p542 = scmp.lt.s32.totalorder %s34, 1
        %s543 = scalar_select %p542, %s34, 1
        %s544 = smul.addr %s543, 8
        %s545 = scalar_lea.vmem %s3, %s544
        %p546 = pneg %p133
        %p547 = pneg %p130
        %p548 = pneg %p154
        %p549 = pneg %p151
        %p550 = pneg %p175
        %p551 = pneg %p172
        %p552 = pneg %p196
        %p553 = pneg %p193
        %p554 = pneg %p217
        %p555 = pneg %p214
        %p556 = pneg %p238
        %p557 = pneg %p235
        %p558 = pneg %p259
        %p559 = pneg %p256
        %p560 = pneg %p280
        %p561 = pneg %p277
        %p562 = pneg %p301
        %p563 = pneg %p298
        %p564 = pneg %p327
        %p565 = pneg %p324
        %s566 = sand.u32 %s314, 1
        %s567 = scalar_lea.sflag [#allocation4], %s566
        %s568 = sand.u32 %s314, 1
        %s569 = smul.addr %s568, 8
        %s570 = scalar_lea.vmem [#allocation14], %s569
        %p571 = scmp.lt.s32.totalorder %s34, 1
        %s572 = scalar_select %p571, %s34, 1
        %s573 = smul.addr %s572, 8
        %s574 = scalar_lea.vmem %s3, %s573
        %v575 = vld [vmem:[%s482] sm:$0xff]
        %v576 = vld [vmem:[%s491] sm:$0xff]
        %v577 = vld [vmem:[%s500] sm:$0xff]
        %v578 = vld [vmem:[#allocation8] sm:$0xff]
        %v579 = vld [vmem:[#allocation8 + $0x8] sm:$0xff]
        %v580 = vld [vmem:[#allocation8 + $0x10] sm:$0xff]
        %v581 = vld [vmem:[#allocation8 + $0x18] sm:$0xff]
        %v582 = vld [vmem:[%s5] sm:$0x1]
        %v584 = vlaneseq
        %v585 = vshrl.u32 %v584, 7
        %v586 = vsub.s32 0, %v585
        %v587 = vrot.slane %v582, %v586
        %vm589 = vcmask 261120
        %v591 = vsel %vm589, %v575, 0
        %593 = vmatprep.subr.mxu0 0.0
        %594 = vmatpush1.msra.mxu0 0.0
        %595 = vmatprep.subr.mxu0 0.0
        %596 = vmatpush1.msra.mxu0 0.0
        %597 = vmatprep.subr.mxu0 0.0
        %598 = vmatpush1.msra.mxu0 0.0
        %599 = vmatprep.subr.mxu0 0.0
        %600 = vmatpush1.msra.mxu0 0.0
        %601 = vmatprep.subr.mxu0 0.0
        %602 = vmatpush1.msra.mxu0 0.0
        %603 = vmatprep.subr.mxu0 0.0
        %604 = vmatpush1.msra.mxu0 0.0
        %605 = vmatprep.subr.mxu0 0.0
        %606 = vmatpush1.msra.mxu0 0.0
        %607 = vmatprep.subr.mxu0 0.0
        %608 = vmatpush1.msra.mxu0 0.0
        %609 = vmatprep.subr.mxu0 0.0
        %610 = vmatpush1.msra.mxu0 0.0
        %611 = vmatprep.subr.mxu0 0.0
        %612 = vmatpush1.msra.mxu0 0.0
        %613 = vmatprep.subr.mxu0 0.0
        %614 = vmatpush1.msra.mxu0 0.0
        %615 = vmatprep.subr.mxu0 0.0
        %616 = vmatpush1.msra.mxu0 0.0
        %617 = vmatprep.subr.mxu0 0.0
        %618 = vmatpush1.msra.mxu0 %v581
        %619 = vmatprep.subr.mxu0 0.0
        %620 = vmatpush1.msra.mxu0 %v580
        %621 = vmatprep.subr.mxu0 0.0
        %622 = vmatpush1.msra.mxu0 %v579
        %623 = vmatprep.subr.mxu0 0.0
        %624 = vmatpush1.msra.mxu0 %v578
        %625 = vmatprep.subr.mxu0 0.0
        %626 = vmatpush2.msra.mxu0 0.0
        %627 = vmatprep.subr.mxu0 0.0
        %628 = vmatpush2.msra.mxu0 0.0
        %629 = vmatprep.subr.mxu0 0.0
        %630 = vmatpush2.msra.mxu0 0.0
        %631 = vmatprep.subr.mxu0 0.0
        %632 = vmatpush2.msra.mxu0 0.0
        %633 = vmatprep.subr.mxu0 0.0
        %634 = vmatpush2.msra.mxu0 0.0
        %635 = vmatprep.subr.mxu0 0.0
        %636 = vmatpush2.msra.mxu0 0.0
        %637 = vmatprep.subr.mxu0 0.0
        %638 = vmatpush2.msra.mxu0 0.0
        %639 = vmatprep.subr.mxu0 0.0
        %640 = vmatpush2.msra.mxu0 0.0
        %641 = vmatprep.subr.mxu0 0.0
        %642 = vmatpush2.msra.mxu0 0.0
        %643 = vmatprep.subr.mxu0 0.0
        %644 = vmatpush2.msra.mxu0 0.0
        %645 = vmatprep.subr.mxu0 0.0
        %646 = vmatpush2.msra.mxu0 0.0
        %647 = vmatprep.subr.mxu0 0.0
        %648 = vmatpush2.msra.mxu0 0.0
        %649 = vmatprep.subr.mxu0 0.0
        %650 = vmatpush2.msra.mxu0 0.0
        %651 = vmatprep.subr.mxu0 0.0
        %652 = vmatpush2.msra.mxu0 0.0
        %653 = vmatprep.subr.mxu0 0.0
        %654 = vmatpush2.msra.mxu0 0.0
        %655 = vmatprep.subr.mxu0 0.0
        %656 = vmatpush2.msra.mxu0 0.0
        %657 = vmatprep.mubr.f32.mxu0 0.0
        %658 = vmatmul.mubr.f32.gmra.mxu0 %v591
        %v659 = vpop.f32.mrf.mxu0
        %v660 = vadd.f32 %v587, %v659
        %v661 = vpop.f32.mrf.mxu0
        %662 = vdwg.mxu0
        %v663 = vmul.f32 %v660, 0.35355338
        %v664 = vld [vmem:[#allocation10] sm:$0xff]
        %v665 = vld [vmem:[#allocation10 + $0x8] sm:$0xff]
        %v666 = vld [vmem:[#allocation10 + $0x10] sm:$0xff]
        %v667 = vld [vmem:[#allocation10 + $0x18] sm:$0xff]
        %v668 = vld [vmem:[%s7] sm:$0x1]
        %v670 = vlaneseq
        %v671 = vshrl.u32 %v670, 7
        %v672 = vsub.s32 0, %v671
        %v673 = vrot.slane %v668, %v672
        %v676 = vsel %vm589, %v576, 0
        %678 = vmatprep.subr.mxu0 0.0
        %679 = vmatpush1.msra.mxu0 0.0
        %680 = vmatprep.subr.mxu0 0.0
        %681 = vmatpush1.msra.mxu0 0.0
        %682 = vmatprep.subr.mxu0 0.0
        %683 = vmatpush1.msra.mxu0 0.0
        %684 = vmatprep.subr.mxu0 0.0
        %685 = vmatpush1.msra.mxu0 0.0
        %686 = vmatprep.subr.mxu0 0.0
        %687 = vmatpush1.msra.mxu0 0.0
        %688 = vmatprep.subr.mxu0 0.0
        %689 = vmatpush1.msra.mxu0 0.0
        %690 = vmatprep.subr.mxu0 0.0
        %691 = vmatpush1.msra.mxu0 0.0
        %692 = vmatprep.subr.mxu0 0.0
        %693 = vmatpush1.msra.mxu0 0.0
        %694 = vmatprep.subr.mxu0 0.0
        %695 = vmatpush1.msra.mxu0 0.0
        %696 = vmatprep.subr.mxu0 0.0
        %697 = vmatpush1.msra.mxu0 0.0
        %698 = vmatprep.subr.mxu0 0.0
        %699 = vmatpush1.msra.mxu0 0.0
        %700 = vmatprep.subr.mxu0 0.0
        %701 = vmatpush1.msra.mxu0 0.0
        %702 = vmatprep.subr.mxu0 0.0
        %703 = vmatpush1.msra.mxu0 %v667
        %704 = vmatprep.subr.mxu0 0.0
        %705 = vmatpush1.msra.mxu0 %v666
        %706 = vmatprep.subr.mxu0 0.0
        %707 = vmatpush1.msra.mxu0 %v665
        %708 = vmatprep.subr.mxu0 0.0
        %709 = vmatpush1.msra.mxu0 %v664
        %710 = vmatprep.subr.mxu0 0.0
        %711 = vmatpush2.msra.mxu0 0.0
        %712 = vmatprep.subr.mxu0 0.0
        %713 = vmatpush2.msra.mxu0 0.0
        %714 = vmatprep.subr.mxu0 0.0
        %715 = vmatpush2.msra.mxu0 0.0
        %716 = vmatprep.subr.mxu0 0.0
        %717 = vmatpush2.msra.mxu0 0.0
        %718 = vmatprep.subr.mxu0 0.0
        %719 = vmatpush2.msra.mxu0 0.0
        %720 = vmatprep.subr.mxu0 0.0
        %721 = vmatpush2.msra.mxu0 0.0
        %722 = vmatprep.subr.mxu0 0.0
        %723 = vmatpush2.msra.mxu0 0.0
        %724 = vmatprep.subr.mxu0 0.0
        %725 = vmatpush2.msra.mxu0 0.0
        %726 = vmatprep.subr.mxu0 0.0
        %727 = vmatpush2.msra.mxu0 0.0
        %728 = vmatprep.subr.mxu0 0.0
        %729 = vmatpush2.msra.mxu0 0.0
        %730 = vmatprep.subr.mxu0 0.0
        %731 = vmatpush2.msra.mxu0 0.0
        %732 = vmatprep.subr.mxu0 0.0
        %733 = vmatpush2.msra.mxu0 0.0
        %734 = vmatprep.subr.mxu0 0.0
        %735 = vmatpush2.msra.mxu0 0.0
        %736 = vmatprep.subr.mxu0 0.0
        %737 = vmatpush2.msra.mxu0 0.0
        %738 = vmatprep.subr.mxu0 0.0
        %739 = vmatpush2.msra.mxu0 0.0
        %740 = vmatprep.subr.mxu0 0.0
        %741 = vmatpush2.msra.mxu0 0.0
        %742 = vmatprep.mubr.f32.mxu0 0.0
        %743 = vmatmul.mubr.f32.gmra.mxu0 %v676
        %v744 = vpop.f32.mrf.mxu0
        %v745 = vadd.f32 %v673, %v744
        %v746 = vpop.f32.mrf.mxu0
        %747 = vdwg.mxu0
        %v748 = vld [vmem:[#allocation11] sm:$0xff]
        %v749 = vld [vmem:[#allocation11 + $0x8] sm:$0xff]
        %v750 = vld [vmem:[#allocation11 + $0x10] sm:$0xff]
        %v751 = vld [vmem:[#allocation11 + $0x18] sm:$0xff]
        %v752 = vld [vmem:[%s9] sm:$0x1]
        %v754 = vlaneseq
        %v755 = vshrl.u32 %v754, 7
        %v756 = vsub.s32 0, %v755
        %v757 = vrot.slane %v752, %v756
        %v760 = vsel %vm589, %v577, 0
        %762 = vmatprep.subr.mxu0 0.0
        %763 = vmatpush1.msra.mxu0 0.0
        %764 = vmatprep.subr.mxu0 0.0
        %765 = vmatpush1.msra.mxu0 0.0
        %766 = vmatprep.subr.mxu0 0.0
        %767 = vmatpush1.msra.mxu0 0.0
        %768 = vmatprep.subr.mxu0 0.0
        %769 = vmatpush1.msra.mxu0 0.0
        %770 = vmatprep.subr.mxu0 0.0
        %771 = vmatpush1.msra.mxu0 0.0
        %772 = vmatprep.subr.mxu0 0.0
        %773 = vmatpush1.msra.mxu0 0.0
        %774 = vmatprep.subr.mxu0 0.0
        %775 = vmatpush1.msra.mxu0 0.0
        %776 = vmatprep.subr.mxu0 0.0
        %777 = vmatpush1.msra.mxu0 0.0
        %778 = vmatprep.subr.mxu0 0.0
        %779 = vmatpush1.msra.mxu0 0.0
        %780 = vmatprep.subr.mxu0 0.0
        %781 = vmatpush1.msra.mxu0 0.0
        %782 = vmatprep.subr.mxu0 0.0
        %783 = vmatpush1.msra.mxu0 0.0
        %784 = vmatprep.subr.mxu0 0.0
        %785 = vmatpush1.msra.mxu0 0.0
        %786 = vmatprep.subr.mxu0 0.0
        %787 = vmatpush1.msra.mxu0 %v751
        %788 = vmatprep.subr.mxu0 0.0
        %789 = vmatpush1.msra.mxu0 %v750
        %790 = vmatprep.subr.mxu0 0.0
        %791 = vmatpush1.msra.mxu0 %v749
        %792 = vmatprep.subr.mxu0 0.0
        %793 = vmatpush1.msra.mxu0 %v748
        %794 = vmatprep.subr.mxu0 0.0
        %795 = vmatpush2.msra.mxu0 0.0
        %796 = vmatprep.subr.mxu0 0.0
        %797 = vmatpush2.msra.mxu0 0.0
        %798 = vmatprep.subr.mxu0 0.0
        %799 = vmatpush2.msra.mxu0 0.0
        %800 = vmatprep.subr.mxu0 0.0
        %801 = vmatpush2.msra.mxu0 0.0
        %802 = vmatprep.subr.mxu0 0.0
        %803 = vmatpush2.msra.mxu0 0.0
        %804 = vmatprep.subr.mxu0 0.0
        %805 = vmatpush2.msra.mxu0 0.0
        %806 = vmatprep.subr.mxu0 0.0
        %807 = vmatpush2.msra.mxu0 0.0
        %808 = vmatprep.subr.mxu0 0.0
        %809 = vmatpush2.msra.mxu0 0.0
        %810 = vmatprep.subr.mxu0 0.0
        %811 = vmatpush2.msra.mxu0 0.0
        %812 = vmatprep.subr.mxu0 0.0
        %813 = vmatpush2.msra.mxu0 0.0
        %814 = vmatprep.subr.mxu0 0.0
        %815 = vmatpush2.msra.mxu0 0.0
        %816 = vmatprep.subr.mxu0 0.0
        %817 = vmatpush2.msra.mxu0 0.0
        %818 = vmatprep.subr.mxu0 0.0
        %819 = vmatpush2.msra.mxu0 0.0
        %820 = vmatprep.subr.mxu0 0.0
        %821 = vmatpush2.msra.mxu0 0.0
        %822 = vmatprep.subr.mxu0 0.0
        %823 = vmatpush2.msra.mxu0 0.0
        %824 = vmatprep.subr.mxu0 0.0
        %825 = vmatpush2.msra.mxu0 0.0
        %826 = vmatprep.mubr.f32.mxu0 0.0
        %827 = vmatmul.mubr.f32.gmra.mxu0 %v760
        %v828 = vpop.f32.mrf.mxu0
        %v829 = vadd.f32 %v757, %v828
        %v830 = vpop.f32.mrf.mxu0
        %831 = vdwg.mxu0
        %v832 = vld [vmem:[%s574] sm:$0xff]
        %v833 = vld [vmem:[#allocation13] sm:$0xff]
        %v834 = vld [vmem:[#allocation13 + $0x8] sm:$0xff]
        %v835 = vld [vmem:[#allocation13 + $0x10] sm:$0xff]
        %v836 = vld [vmem:[#allocation13 + $0x18] sm:$0xff]
        %v837 = vld [vmem:[%s11] sm:$0x1]
        %v839 = vlaneseq
        %v840 = vshrl.u32 %v839, 7
        %v841 = vsub.s32 0, %v840
        %v842 = vrot.slane %v837, %v841
        %vm844 = vcmask 64512
        %v846 = vsel %vm844, %v663, 0
        %v849 = vsel %vm844, %v745, 0
        %851 = vmatprep.subr.mxu0 0.0
        %852 = vmatpush1.xpose.msra.mxu0 0.0
        %853 = vmatprep.subr.mxu0 0.0
        %854 = vmatpush1.xpose.msra.mxu0 0.0
        %855 = vmatprep.subr.mxu0 0.0
        %856 = vmatpush1.xpose.msra.mxu0 0.0
        %857 = vmatprep.subr.mxu0 0.0
        %858 = vmatpush1.xpose.msra.mxu0 0.0
        %859 = vmatprep.subr.mxu0 0.0
        %860 = vmatpush1.xpose.msra.mxu0 0.0
        %861 = vmatprep.subr.mxu0 0.0
        %862 = vmatpush1.xpose.msra.mxu0 0.0
        %863 = vmatprep.subr.mxu0 0.0
        %864 = vmatpush1.xpose.msra.mxu0 0.0
        %865 = vmatprep.subr.mxu0 0.0
        %866 = vmatpush1.xpose.msra.mxu0 0.0
        %867 = vmatprep.subr.mxu0 0.0
        %868 = vmatpush1.xpose.msra.mxu0 0.0
        %869 = vmatprep.subr.mxu0 0.0
        %870 = vmatpush1.xpose.msra.mxu0 0.0
        %871 = vmatprep.subr.mxu0 0.0
        %872 = vmatpush1.xpose.msra.mxu0 0.0
        %873 = vmatprep.subr.mxu0 0.0
        %874 = vmatpush1.xpose.msra.mxu0 0.0
        %875 = vmatprep.subr.mxu0 0.0
        %876 = vmatpush1.xpose.msra.mxu0 0.0
        %877 = vmatprep.subr.mxu0 0.0
        %878 = vmatpush1.xpose.msra.mxu0 0.0
        %879 = vmatprep.subr.mxu0 0.0
        %880 = vmatpush1.xpose.msra.mxu0 0.0
        %881 = vmatprep.subr.mxu0 0.0
        %882 = vmatpush1.xpose.msra.mxu0 %v849
        %883 = vmatprep.subr.mxu0 0.0
        %884 = vmatpush2.xpose.msra.mxu0 0.0
        %885 = vmatprep.subr.mxu0 0.0
        %886 = vmatpush2.xpose.msra.mxu0 0.0
        %887 = vmatprep.subr.mxu0 0.0
        %888 = vmatpush2.xpose.msra.mxu0 0.0
        %889 = vmatprep.subr.mxu0 0.0
        %890 = vmatpush2.xpose.msra.mxu0 0.0
        %891 = vmatprep.subr.mxu0 0.0
        %892 = vmatpush2.xpose.msra.mxu0 0.0
        %893 = vmatprep.subr.mxu0 0.0
        %894 = vmatpush2.xpose.msra.mxu0 0.0
        %895 = vmatprep.subr.mxu0 0.0
        %896 = vmatpush2.xpose.msra.mxu0 0.0
        %897 = vmatprep.subr.mxu0 0.0
        %898 = vmatpush2.xpose.msra.mxu0 0.0
        %899 = vmatprep.subr.mxu0 0.0
        %900 = vmatpush2.xpose.msra.mxu0 0.0
        %901 = vmatprep.subr.mxu0 0.0
        %902 = vmatpush2.xpose.msra.mxu0 0.0
        %903 = vmatprep.subr.mxu0 0.0
        %904 = vmatpush2.xpose.msra.mxu0 0.0
        %905 = vmatprep.subr.mxu0 0.0
        %906 = vmatpush2.xpose.msra.mxu0 0.0
        %907 = vmatprep.subr.mxu0 0.0
        %908 = vmatpush2.xpose.msra.mxu0 0.0
        %909 = vmatprep.subr.mxu0 0.0
        %910 = vmatpush2.xpose.msra.mxu0 0.0
        %911 = vmatprep.subr.mxu0 0.0
        %912 = vmatpush2.xpose.msra.mxu0 0.0
        %913 = vmatprep.subr.mxu0 0.0
        %914 = vmatpush2.xpose.msra.mxu0 0.0
        %915 = vmatprep.mubr.f32.mxu0 0.0
        %916 = vmatmul.mubr.f32.gmra.mxu0 %v846
        %v917 = vpop.f32.mrf.mxu0
        %v918 = vadd.f32 %v832, %v917
        %v919 = vpop.f32.mrf.mxu0
        %920 = vdwg.mxu0
        %v921 = vsel %vm844, %v918, -inf
        %922 = vmax.xlane.f32.xlu0 %v921
        %v923 = vpop.xlane.xlu0 %922
        %v924 = vsub.f32 %v918, %v923
        %v925 = vmul.f32 %v924, 1.442695
        %v926 = vpow.pop %v925
        %v927 = vsel %vm844, %v926, 0.0
        %928 = vadd.xlane.f32.xlu0 %v927
        %v929 = vpop.xlane.xlu0 %928
        %v930 = vrcp.pop %v929
        %v931 = vmul.f32 %v926, %v930
        %v933 = vsel %vm844, %v931, 0
        %935 = vmatprep.subr.mxu0 0.0
        %936 = vmatpush1.msra.mxu0 0.0
        %937 = vmatprep.subr.mxu0 0.0
        %938 = vmatpush1.msra.mxu0 0.0
        %939 = vmatprep.subr.mxu0 0.0
        %940 = vmatpush1.msra.mxu0 0.0
        %941 = vmatprep.subr.mxu0 0.0
        %942 = vmatpush1.msra.mxu0 0.0
        %943 = vmatprep.subr.mxu0 0.0
        %944 = vmatpush1.msra.mxu0 0.0
        %945 = vmatprep.subr.mxu0 0.0
        %946 = vmatpush1.msra.mxu0 0.0
        %947 = vmatprep.subr.mxu0 0.0
        %948 = vmatpush1.msra.mxu0 0.0
        %949 = vmatprep.subr.mxu0 0.0
        %950 = vmatpush1.msra.mxu0 0.0
        %951 = vmatprep.subr.mxu0 0.0
        %952 = vmatpush1.msra.mxu0 0.0
        %953 = vmatprep.subr.mxu0 0.0
        %954 = vmatpush1.msra.mxu0 0.0
        %955 = vmatprep.subr.mxu0 0.0
        %956 = vmatpush1.msra.mxu0 0.0
        %957 = vmatprep.subr.mxu0 0.0
        %958 = vmatpush1.msra.mxu0 0.0
        %959 = vmatprep.subr.mxu0 0.0
        %960 = vmatpush1.msra.mxu0 0.0
        %961 = vmatprep.subr.mxu0 0.0
        %962 = vmatpush1.msra.mxu0 0.0
        %963 = vmatprep.subr.mxu0 0.0
        %964 = vmatpush1.msra.mxu0 0.0
        %965 = vmatprep.subr.mxu0 0.0
        %966 = vmatpush1.msra.mxu0 %v829
        %967 = vmatprep.subr.mxu0 0.0
        %968 = vmatpush2.msra.mxu0 0.0
        %969 = vmatprep.subr.mxu0 0.0
        %970 = vmatpush2.msra.mxu0 0.0
        %971 = vmatprep.subr.mxu0 0.0
        %972 = vmatpush2.msra.mxu0 0.0
        %973 = vmatprep.subr.mxu0 0.0
        %974 = vmatpush2.msra.mxu0 0.0
        %975 = vmatprep.subr.mxu0 0.0
        %976 = vmatpush2.msra.mxu0 0.0
        %977 = vmatprep.subr.mxu0 0.0
        %978 = vmatpush2.msra.mxu0 0.0
        %979 = vmatprep.subr.mxu0 0.0
        %980 = vmatpush2.msra.mxu0 0.0
        %981 = vmatprep.subr.mxu0 0.0
        %982 = vmatpush2.msra.mxu0 0.0
        %983 = vmatprep.subr.mxu0 0.0
        %984 = vmatpush2.msra.mxu0 0.0
        %985 = vmatprep.subr.mxu0 0.0
        %986 = vmatpush2.msra.mxu0 0.0
        %987 = vmatprep.subr.mxu0 0.0
        %988 = vmatpush2.msra.mxu0 0.0
        %989 = vmatprep.subr.mxu0 0.0
        %990 = vmatpush2.msra.mxu0 0.0
        %991 = vmatprep.subr.mxu0 0.0
        %992 = vmatpush2.msra.mxu0 0.0
        %993 = vmatprep.subr.mxu0 0.0
        %994 = vmatpush2.msra.mxu0 0.0
        %995 = vmatprep.subr.mxu0 0.0
        %996 = vmatpush2.msra.mxu0 0.0
        %997 = vmatprep.subr.mxu0 0.0
        %998 = vmatpush2.msra.mxu0 0.0
        %999 = vmatprep.mubr.f32.mxu0 0.0
        %1000 = vmatmul.mubr.f32.gmra.mxu0 %v933
        %v1001 = vpop.f32.mrf.mxu0
        %v1002 = vadd.f32 0.0, %v1001
        %v1003 = vpop.f32.mrf.mxu0
        %1004 = vdwg.mxu0
        %v1006 = vsel %vm844, %v1002, 0
        %1008 = vmatprep.subr.mxu0 0.0
        %1009 = vmatpush1.msra.mxu0 0.0
        %1010 = vmatprep.subr.mxu0 0.0
        %1011 = vmatpush1.msra.mxu0 0.0
        %1012 = vmatprep.subr.mxu0 0.0
        %1013 = vmatpush1.msra.mxu0 0.0
        %1014 = vmatprep.subr.mxu0 0.0
        %1015 = vmatpush1.msra.mxu0 0.0
        %1016 = vmatprep.subr.mxu0 0.0
        %1017 = vmatpush1.msra.mxu0 0.0
        %1018 = vmatprep.subr.mxu0 0.0
        %1019 = vmatpush1.msra.mxu0 0.0
        %1020 = vmatprep.subr.mxu0 0.0
        %1021 = vmatpush1.msra.mxu0 0.0
        %1022 = vmatprep.subr.mxu0 0.0
        %1023 = vmatpush1.msra.mxu0 0.0
        %1024 = vmatprep.subr.mxu0 0.0
        %1025 = vmatpush1.msra.mxu0 0.0
        %1026 = vmatprep.subr.mxu0 0.0
        %1027 = vmatpush1.msra.mxu0 0.0
        %1028 = vmatprep.subr.mxu0 0.0
        %1029 = vmatpush1.msra.mxu0 0.0
        %1030 = vmatprep.subr.mxu0 0.0
        %1031 = vmatpush1.msra.mxu0 0.0
        %1032 = vmatprep.subr.mxu0 0.0
        %1033 = vmatpush1.msra.mxu0 0.0
        %1034 = vmatprep.subr.mxu0 0.0
        %1035 = vmatpush1.msra.mxu0 0.0
        %1036 = vmatprep.subr.mxu0 0.0
        %1037 = vmatpush1.msra.mxu0 0.0
        %1038 = vmatprep.subr.mxu0 0.0
        %1039 = vmatpush1.msra.mxu0 %v833
        %1040 = vmatprep.subr.mxu0 0.0
        %1041 = vmatpush2.msra.mxu0 0.0
        %1042 = vmatprep.subr.mxu0 0.0
        %1043 = vmatpush2.msra.mxu0 0.0
        %1044 = vmatprep.subr.mxu0 0.0
        %1045 = vmatpush2.msra.mxu0 0.0
        %1046 = vmatprep.subr.mxu0 0.0
        %1047 = vmatpush2.msra.mxu0 0.0
        %1048 = vmatprep.subr.mxu0 0.0
        %1049 = vmatpush2.msra.mxu0 0.0
        %1050 = vmatprep.subr.mxu0 0.0
        %1051 = vmatpush2.msra.mxu0 0.0
        %1052 = vmatprep.subr.mxu0 0.0
        %1053 = vmatpush2.msra.mxu0 0.0
        %1054 = vmatprep.subr.mxu0 0.0
        %1055 = vmatpush2.msra.mxu0 0.0
        %1056 = vmatprep.subr.mxu0 0.0
        %1057 = vmatpush2.msra.mxu0 0.0
        %1058 = vmatprep.subr.mxu0 0.0
        %1059 = vmatpush2.msra.mxu0 0.0
        %1060 = vmatprep.subr.mxu0 0.0
        %1061 = vmatpush2.msra.mxu0 0.0
        %1062 = vmatprep.subr.mxu0 0.0
        %1063 = vmatpush2.msra.mxu0 0.0
        %1064 = vmatprep.subr.mxu0 0.0
        %1065 = vmatpush2.msra.mxu0 0.0
        %1066 = vmatprep.subr.mxu0 0.0
        %1067 = vmatpush2.msra.mxu0 0.0
        %1068 = vmatprep.subr.mxu0 0.0
        %1069 = vmatpush2.msra.mxu0 0.0
        %1070 = vmatprep.subr.mxu0 0.0
        %1071 = vmatpush2.msra.mxu0 0.0
        %1072 = vmatprep.mubr.f32.mxu0 0.0
        %1073 = vmatmul.mubr.f32.gmra.mxu0 %v1006
        %v1074 = vpop.f32.mrf.mxu0
        %v1075 = vadd.f32 0.0, %v1074
        %v1076 = vpop.f32.mrf.mxu0
        %1077 = vdwg.mxu0
        %v1078 = vadd.f32 %v842, %v1075
        %1079 = vrot.lane.b32.xlu0 %v663, 120
        %v1080 = vpop.permute.xlu0 %1079
        %1081 = vrot.lane.b32.xlu0 %v745, 120
        %v1082 = vpop.permute.xlu0 %1081
        %v1083 = vsel %vm844, %v1080, 0
        %v1085 = vsel %vm844, %v1082, 0
        %1087 = vmatprep.subr.mxu0 0.0
        %1088 = vmatpush1.xpose.msra.mxu0 0.0
        %1089 = vmatprep.subr.mxu0 0.0
        %1090 = vmatpush1.xpose.msra.mxu0 0.0
        %1091 = vmatprep.subr.mxu0 0.0
        %1092 = vmatpush1.xpose.msra.mxu0 0.0
        %1093 = vmatprep.subr.mxu0 0.0
        %1094 = vmatpush1.xpose.msra.mxu0 0.0
        %1095 = vmatprep.subr.mxu0 0.0
        %1096 = vmatpush1.xpose.msra.mxu0 0.0
        %1097 = vmatprep.subr.mxu0 0.0
        %1098 = vmatpush1.xpose.msra.mxu0 0.0
        %1099 = vmatprep.subr.mxu0 0.0
        %1100 = vmatpush1.xpose.msra.mxu0 0.0
        %1101 = vmatprep.subr.mxu0 0.0
        %1102 = vmatpush1.xpose.msra.mxu0 0.0
        %1103 = vmatprep.subr.mxu0 0.0
        %1104 = vmatpush1.xpose.msra.mxu0 0.0
        %1105 = vmatprep.subr.mxu0 0.0
        %1106 = vmatpush1.xpose.msra.mxu0 0.0
        %1107 = vmatprep.subr.mxu0 0.0
        %1108 = vmatpush1.xpose.msra.mxu0 0.0
        %1109 = vmatprep.subr.mxu0 0.0
        %1110 = vmatpush1.xpose.msra.mxu0 0.0
        %1111 = vmatprep.subr.mxu0 0.0
        %1112 = vmatpush1.xpose.msra.mxu0 0.0
        %1113 = vmatprep.subr.mxu0 0.0
        %1114 = vmatpush1.xpose.msra.mxu0 0.0
        %1115 = vmatprep.subr.mxu0 0.0
        %1116 = vmatpush1.xpose.msra.mxu0 0.0
        %1117 = vmatprep.subr.mxu0 0.0
        %1118 = vmatpush1.xpose.msra.mxu0 %v1085
        %1119 = vmatprep.subr.mxu0 0.0
        %1120 = vmatpush2.xpose.msra.mxu0 0.0
        %1121 = vmatprep.subr.mxu0 0.0
        %1122 = vmatpush2.xpose.msra.mxu0 0.0
        %1123 = vmatprep.subr.mxu0 0.0
        %1124 = vmatpush2.xpose.msra.mxu0 0.0
        %1125 = vmatprep.subr.mxu0 0.0
        %1126 = vmatpush2.xpose.msra.mxu0 0.0
        %1127 = vmatprep.subr.mxu0 0.0
        %1128 = vmatpush2.xpose.msra.mxu0 0.0
        %1129 = vmatprep.subr.mxu0 0.0
        %1130 = vmatpush2.xpose.msra.mxu0 0.0
        %1131 = vmatprep.subr.mxu0 0.0
        %1132 = vmatpush2.xpose.msra.mxu0 0.0
        %1133 = vmatprep.subr.mxu0 0.0
        %1134 = vmatpush2.xpose.msra.mxu0 0.0
        %1135 = vmatprep.subr.mxu0 0.0
        %1136 = vmatpush2.xpose.msra.mxu0 0.0
        %1137 = vmatprep.subr.mxu0 0.0
        %1138 = vmatpush2.xpose.msra.mxu0 0.0
        %1139 = vmatprep.subr.mxu0 0.0
        %1140 = vmatpush2.xpose.msra.mxu0 0.0
        %1141 = vmatprep.subr.mxu0 0.0
        %1142 = vmatpush2.xpose.msra.mxu0 0.0
        %1143 = vmatprep.subr.mxu0 0.0
        %1144 = vmatpush2.xpose.msra.mxu0 0.0
        %1145 = vmatprep.subr.mxu0 0.0
        %1146 = vmatpush2.xpose.msra.mxu0 0.0
        %1147 = vmatprep.subr.mxu0 0.0
        %1148 = vmatpush2.xpose.msra.mxu0 0.0
        %1149 = vmatprep.subr.mxu0 0.0
        %1150 = vmatpush2.xpose.msra.mxu0 0.0
        %1151 = vmatprep.mubr.f32.mxu0 0.0
        %1152 = vmatmul.mubr.f32.gmra.mxu0 %v1083
        %v1153 = vpop.f32.mrf.mxu0
        %v1154 = vadd.f32 %v832, %v1153
        %v1155 = vpop.f32.mrf.mxu0
        %1156 = vdwg.mxu0
        %v1157 = vsel %vm844, %v1154, -inf
        %1158 = vmax.xlane.f32.xlu0 %v1157
        %v1159 = vpop.xlane.xlu0 %1158
        %v1160 = vsub.f32 %v1154, %v1159
        %v1161 = vmul.f32 %v1160, 1.442695
        %v1162 = vpow.pop %v1161
        %v1163 = vsel %vm844, %v1162, 0.0
        %1164 = vadd.xlane.f32.xlu0 %v1163
        %v1165 = vpop.xlane.xlu0 %1164
        %v1166 = vrcp.pop %v1165
        %v1167 = vmul.f32 %v1162, %v1166
        %1169 = vrot.lane.b32.xlu0 %v829, 120
        %v1170 = vpop.permute.xlu0 %1169
        %v1173 = vsel %vm844, %v1167, 0
        %1175 = vmatprep.subr.mxu0 0.0
        %1176 = vmatpush1.msra.mxu0 0.0
        %1177 = vmatprep.subr.mxu0 0.0
        %1178 = vmatpush1.msra.mxu0 0.0
        %1179 = vmatprep.subr.mxu0 0.0
        %1180 = vmatpush1.msra.mxu0 0.0
        %1181 = vmatprep.subr.mxu0 0.0
        %1182 = vmatpush1.msra.mxu0 0.0
        %1183 = vmatprep.subr.mxu0 0.0
        %1184 = vmatpush1.msra.mxu0 0.0
        %1185 = vmatprep.subr.mxu0 0.0
        %1186 = vmatpush1.msra.mxu0 0.0
        %1187 = vmatprep.subr.mxu0 0.0
        %1188 = vmatpush1.msra.mxu0 0.0
        %1189 = vmatprep.subr.mxu0 0.0
        %1190 = vmatpush1.msra.mxu0 0.0
        %1191 = vmatprep.subr.mxu0 0.0
        %1192 = vmatpush1.msra.mxu0 0.0
        %1193 = vmatprep.subr.mxu0 0.0
        %1194 = vmatpush1.msra.mxu0 0.0
        %1195 = vmatprep.subr.mxu0 0.0
        %1196 = vmatpush1.msra.mxu0 0.0
        %1197 = vmatprep.subr.mxu0 0.0
        %1198 = vmatpush1.msra.mxu0 0.0
        %1199 = vmatprep.subr.mxu0 0.0
        %1200 = vmatpush1.msra.mxu0 0.0
        %1201 = vmatprep.subr.mxu0 0.0
        %1202 = vmatpush1.msra.mxu0 0.0
        %1203 = vmatprep.subr.mxu0 0.0
        %1204 = vmatpush1.msra.mxu0 0.0
        %1205 = vmatprep.subr.mxu0 0.0
        %1206 = vmatpush1.msra.mxu0 %v1170
        %1207 = vmatprep.subr.mxu0 0.0
        %1208 = vmatpush2.msra.mxu0 0.0
        %1209 = vmatprep.subr.mxu0 0.0
        %1210 = vmatpush2.msra.mxu0 0.0
        %1211 = vmatprep.subr.mxu0 0.0
        %1212 = vmatpush2.msra.mxu0 0.0
        %1213 = vmatprep.subr.mxu0 0.0
        %1214 = vmatpush2.msra.mxu0 0.0
        %1215 = vmatprep.subr.mxu0 0.0
        %1216 = vmatpush2.msra.mxu0 0.0
        %1217 = vmatprep.subr.mxu0 0.0
        %1218 = vmatpush2.msra.mxu0 0.0
        %1219 = vmatprep.subr.mxu0 0.0
        %1220 = vmatpush2.msra.mxu0 0.0
        %1221 = vmatprep.subr.mxu0 0.0
        %1222 = vmatpush2.msra.mxu0 0.0
        %1223 = vmatprep.subr.mxu0 0.0
        %1224 = vmatpush2.msra.mxu0 0.0
        %1225 = vmatprep.subr.mxu0 0.0
        %1226 = vmatpush2.msra.mxu0 0.0
        %1227 = vmatprep.subr.mxu0 0.0
        %1228 = vmatpush2.msra.mxu0 0.0
        %1229 = vmatprep.subr.mxu0 0.0
        %1230 = vmatpush2.msra.mxu0 0.0
        %1231 = vmatprep.subr.mxu0 0.0
        %1232 = vmatpush2.msra.mxu0 0.0
        %1233 = vmatprep.subr.mxu0 0.0
        %1234 = vmatpush2.msra.mxu0 0.0
        %1235 = vmatprep.subr.mxu0 0.0
        %1236 = vmatpush2.msra.mxu0 0.0
        %1237 = vmatprep.subr.mxu0 0.0
        %1238 = vmatpush2.msra.mxu0 0.0
        %1239 = vmatprep.mubr.f32.mxu0 0.0
        %1240 = vmatmul.mubr.f32.gmra.mxu0 %v1173
        %v1241 = vpop.f32.mrf.mxu0
        %v1242 = vadd.f32 0.0, %v1241
        %v1243 = vpop.f32.mrf.mxu0
        %1244 = vdwg.mxu0
        %v1246 = vsel %vm844, %v1242, 0
        %1248 = vmatprep.subr.mxu0 0.0
        %1249 = vmatpush1.msra.mxu0 0.0
        %1250 = vmatprep.subr.mxu0 0.0
        %1251 = vmatpush1.msra.mxu0 0.0
        %1252 = vmatprep.subr.mxu0 0.0
        %1253 = vmatpush1.msra.mxu0 0.0
        %1254 = vmatprep.subr.mxu0 0.0
        %1255 = vmatpush1.msra.mxu0 0.0
        %1256 = vmatprep.subr.mxu0 0.0
        %1257 = vmatpush1.msra.mxu0 0.0
        %1258 = vmatprep.subr.mxu0 0.0
        %1259 = vmatpush1.msra.mxu0 0.0
        %1260 = vmatprep.subr.mxu0 0.0
        %1261 = vmatpush1.msra.mxu0 0.0
        %1262 = vmatprep.subr.mxu0 0.0
        %1263 = vmatpush1.msra.mxu0 0.0
        %1264 = vmatprep.subr.mxu0 0.0
        %1265 = vmatpush1.msra.mxu0 0.0
        %1266 = vmatprep.subr.mxu0 0.0
        %1267 = vmatpush1.msra.mxu0 0.0
        %1268 = vmatprep.subr.mxu0 0.0
        %1269 = vmatpush1.msra.mxu0 0.0
        %1270 = vmatprep.subr.mxu0 0.0
        %1271 = vmatpush1.msra.mxu0 0.0
        %1272 = vmatprep.subr.mxu0 0.0
        %1273 = vmatpush1.msra.mxu0 0.0
        %1274 = vmatprep.subr.mxu0 0.0
        %1275 = vmatpush1.msra.mxu0 0.0
        %1276 = vmatprep.subr.mxu0 0.0
        %1277 = vmatpush1.msra.mxu0 0.0
        %1278 = vmatprep.subr.mxu0 0.0
        %1279 = vmatpush1.msra.mxu0 %v834
        %1280 = vmatprep.subr.mxu0 0.0
        %1281 = vmatpush2.msra.mxu0 0.0
        %1282 = vmatprep.subr.mxu0 0.0
        %1283 = vmatpush2.msra.mxu0 0.0
        %1284 = vmatprep.subr.mxu0 0.0
        %1285 = vmatpush2.msra.mxu0 0.0
        %1286 = vmatprep.subr.mxu0 0.0
        %1287 = vmatpush2.msra.mxu0 0.0
        %1288 = vmatprep.subr.mxu0 0.0
        %1289 = vmatpush2.msra.mxu0 0.0
        %1290 = vmatprep.subr.mxu0 0.0
        %1291 = vmatpush2.msra.mxu0 0.0
        %1292 = vmatprep.subr.mxu0 0.0
        %1293 = vmatpush2.msra.mxu0 0.0
        %1294 = vmatprep.subr.mxu0 0.0
        %1295 = vmatpush2.msra.mxu0 0.0
        %1296 = vmatprep.subr.mxu0 0.0
        %1297 = vmatpush2.msra.mxu0 0.0
        %1298 = vmatprep.subr.mxu0 0.0
        %1299 = vmatpush2.msra.mxu0 0.0
        %1300 = vmatprep.subr.mxu0 0.0
        %1301 = vmatpush2.msra.mxu0 0.0
        %1302 = vmatprep.subr.mxu0 0.0
        %1303 = vmatpush2.msra.mxu0 0.0
        %1304 = vmatprep.subr.mxu0 0.0
        %1305 = vmatpush2.msra.mxu0 0.0
        %1306 = vmatprep.subr.mxu0 0.0
        %1307 = vmatpush2.msra.mxu0 0.0
        %1308 = vmatprep.subr.mxu0 0.0
        %1309 = vmatpush2.msra.mxu0 0.0
        %1310 = vmatprep.subr.mxu0 0.0
        %1311 = vmatpush2.msra.mxu0 0.0
        %1312 = vmatprep.mubr.f32.mxu0 0.0
        %1313 = vmatmul.mubr.f32.gmra.mxu0 %v1246
        %v1314 = vpop.f32.mrf.mxu0
        %v1315 = vadd.f32 0.0, %v1314
        %v1316 = vpop.f32.mrf.mxu0
        %1317 = vdwg.mxu0
        %v1318 = vadd.f32 %v1078, %v1315
        %1319 = vrot.lane.b32.xlu0 %v663, 112
        %v1320 = vpop.permute.xlu0 %1319
        %1321 = vrot.lane.b32.xlu0 %v745, 112
        %v1322 = vpop.permute.xlu0 %1321
        %v1323 = vsel %vm844, %v1320, 0
        %v1325 = vsel %vm844, %v1322, 0
        %1327 = vmatprep.subr.mxu0 0.0
        %1328 = vmatpush1.xpose.msra.mxu0 0.0
        %1329 = vmatprep.subr.mxu0 0.0
        %1330 = vmatpush1.xpose.msra.mxu0 0.0
        %1331 = vmatprep.subr.mxu0 0.0
        %1332 = vmatpush1.xpose.msra.mxu0 0.0
        %1333 = vmatprep.subr.mxu0 0.0
        %1334 = vmatpush1.xpose.msra.mxu0 0.0
        %1335 = vmatprep.subr.mxu0 0.0
        %1336 = vmatpush1.xpose.msra.mxu0 0.0
        %1337 = vmatprep.subr.mxu0 0.0
        %1338 = vmatpush1.xpose.msra.mxu0 0.0
        %1339 = vmatprep.subr.mxu0 0.0
        %1340 = vmatpush1.xpose.msra.mxu0 0.0
        %1341 = vmatprep.subr.mxu0 0.0
        %1342 = vmatpush1.xpose.msra.mxu0 0.0
        %1343 = vmatprep.subr.mxu0 0.0
        %1344 = vmatpush1.xpose.msra.mxu0 0.0
        %1345 = vmatprep.subr.mxu0 0.0
        %1346 = vmatpush1.xpose.msra.mxu0 0.0
        %1347 = vmatprep.subr.mxu0 0.0
        %1348 = vmatpush1.xpose.msra.mxu0 0.0
        %1349 = vmatprep.subr.mxu0 0.0
        %1350 = vmatpush1.xpose.msra.mxu0 0.0
        %1351 = vmatprep.subr.mxu0 0.0
        %1352 = vmatpush1.xpose.msra.mxu0 0.0
        %1353 = vmatprep.subr.mxu0 0.0
        %1354 = vmatpush1.xpose.msra.mxu0 0.0
        %1355 = vmatprep.subr.mxu0 0.0
        %1356 = vmatpush1.xpose.msra.mxu0 0.0
        %1357 = vmatprep.subr.mxu0 0.0
        %1358 = vmatpush1.xpose.msra.mxu0 %v1325
        %1359 = vmatprep.subr.mxu0 0.0
        %1360 = vmatpush2.xpose.msra.mxu0 0.0
        %1361 = vmatprep.subr.mxu0 0.0
        %1362 = vmatpush2.xpose.msra.mxu0 0.0
        %1363 = vmatprep.subr.mxu0 0.0
        %1364 = vmatpush2.xpose.msra.mxu0 0.0
        %1365 = vmatprep.subr.mxu0 0.0
        %1366 = vmatpush2.xpose.msra.mxu0 0.0
        %1367 = vmatprep.subr.mxu0 0.0
        %1368 = vmatpush2.xpose.msra.mxu0 0.0
        %1369 = vmatprep.subr.mxu0 0.0
        %1370 = vmatpush2.xpose.msra.mxu0 0.0
        %1371 = vmatprep.subr.mxu0 0.0
        %1372 = vmatpush2.xpose.msra.mxu0 0.0
        %1373 = vmatprep.subr.mxu0 0.0
        %1374 = vmatpush2.xpose.msra.mxu0 0.0
        %1375 = vmatprep.subr.mxu0 0.0
        %1376 = vmatpush2.xpose.msra.mxu0 0.0
        %1377 = vmatprep.subr.mxu0 0.0
        %1378 = vmatpush2.xpose.msra.mxu0 0.0
        %1379 = vmatprep.subr.mxu0 0.0
        %1380 = vmatpush2.xpose.msra.mxu0 0.0
        %1381 = vmatprep.subr.mxu0 0.0
        %1382 = vmatpush2.xpose.msra.mxu0 0.0
        %1383 = vmatprep.subr.mxu0 0.0
        %1384 = vmatpush2.xpose.msra.mxu0 0.0
        %1385 = vmatprep.subr.mxu0 0.0
        %1386 = vmatpush2.xpose.msra.mxu0 0.0
        %1387 = vmatprep.subr.mxu0 0.0
        %1388 = vmatpush2.xpose.msra.mxu0 0.0
        %1389 = vmatprep.subr.mxu0 0.0
        %1390 = vmatpush2.xpose.msra.mxu0 0.0
        %1391 = vmatprep.mubr.f32.mxu0 0.0
        %1392 = vmatmul.mubr.f32.gmra.mxu0 %v1323
        %v1393 = vpop.f32.mrf.mxu0
        %v1394 = vadd.f32 %v832, %v1393
        %v1395 = vpop.f32.mrf.mxu0
        %1396 = vdwg.mxu0
        %v1397 = vsel %vm844, %v1394, -inf
        %1398 = vmax.xlane.f32.xlu0 %v1397
        %v1399 = vpop.xlane.xlu0 %1398
        %v1400 = vsub.f32 %v1394, %v1399
        %v1401 = vmul.f32 %v1400, 1.442695
        %v1402 = vpow.pop %v1401
        %v1403 = vsel %vm844, %v1402, 0.0
        %1404 = vadd.xlane.f32.xlu0 %v1403
        %v1405 = vpop.xlane.xlu0 %1404
        %v1406 = vrcp.pop %v1405
        %v1407 = vmul.f32 %v1402, %v1406
        %1408 = vrot.lane.b32.xlu0 %v829, 112
        %v1409 = vpop.permute.xlu0 %1408
        %v1412 = vsel %vm844, %v1407, 0
        %1414 = vmatprep.subr.mxu0 0.0
        %1415 = vmatpush1.msra.mxu0 0.0
        %1416 = vmatprep.subr.mxu0 0.0
        %1417 = vmatpush1.msra.mxu0 0.0
        %1418 = vmatprep.subr.mxu0 0.0
        %1419 = vmatpush1.msra.mxu0 0.0
        %1420 = vmatprep.subr.mxu0 0.0
        %1421 = vmatpush1.msra.mxu0 0.0
        %1422 = vmatprep.subr.mxu0 0.0
        %1423 = vmatpush1.msra.mxu0 0.0
        %1424 = vmatprep.subr.mxu0 0.0
        %1425 = vmatpush1.msra.mxu0 0.0
        %1426 = vmatprep.subr.mxu0 0.0
        %1427 = vmatpush1.msra.mxu0 0.0
        %1428 = vmatprep.subr.mxu0 0.0
        %1429 = vmatpush1.msra.mxu0 0.0
        %1430 = vmatprep.subr.mxu0 0.0
        %1431 = vmatpush1.msra.mxu0 0.0
        %1432 = vmatprep.subr.mxu0 0.0
        %1433 = vmatpush1.msra.mxu0 0.0
        %1434 = vmatprep.subr.mxu0 0.0
        %1435 = vmatpush1.msra.mxu0 0.0
        %1436 = vmatprep.subr.mxu0 0.0
        %1437 = vmatpush1.msra.mxu0 0.0
        %1438 = vmatprep.subr.mxu0 0.0
        %1439 = vmatpush1.msra.mxu0 0.0
        %1440 = vmatprep.subr.mxu0 0.0
        %1441 = vmatpush1.msra.mxu0 0.0
        %1442 = vmatprep.subr.mxu0 0.0
        %1443 = vmatpush1.msra.mxu0 0.0
        %1444 = vmatprep.subr.mxu0 0.0
        %1445 = vmatpush1.msra.mxu0 %v1409
        %1446 = vmatprep.subr.mxu0 0.0
        %1447 = vmatpush2.msra.mxu0 0.0
        %1448 = vmatprep.subr.mxu0 0.0
        %1449 = vmatpush2.msra.mxu0 0.0
        %1450 = vmatprep.subr.mxu0 0.0
        %1451 = vmatpush2.msra.mxu0 0.0
        %1452 = vmatprep.subr.mxu0 0.0
        %1453 = vmatpush2.msra.mxu0 0.0
        %1454 = vmatprep.subr.mxu0 0.0
        %1455 = vmatpush2.msra.mxu0 0.0
        %1456 = vmatprep.subr.mxu0 0.0
        %1457 = vmatpush2.msra.mxu0 0.0
        %1458 = vmatprep.subr.mxu0 0.0
        %1459 = vmatpush2.msra.mxu0 0.0
        %1460 = vmatprep.subr.mxu0 0.0
        %1461 = vmatpush2.msra.mxu0 0.0
        %1462 = vmatprep.subr.mxu0 0.0
        %1463 = vmatpush2.msra.mxu0 0.0
        %1464 = vmatprep.subr.mxu0 0.0
        %1465 = vmatpush2.msra.mxu0 0.0
        %1466 = vmatprep.subr.mxu0 0.0
        %1467 = vmatpush2.msra.mxu0 0.0
        %1468 = vmatprep.subr.mxu0 0.0
        %1469 = vmatpush2.msra.mxu0 0.0
        %1470 = vmatprep.subr.mxu0 0.0
        %1471 = vmatpush2.msra.mxu0 0.0
        %1472 = vmatprep.subr.mxu0 0.0
        %1473 = vmatpush2.msra.mxu0 0.0
        %1474 = vmatprep.subr.mxu0 0.0
        %1475 = vmatpush2.msra.mxu0 0.0
        %1476 = vmatprep.subr.mxu0 0.0
        %1477 = vmatpush2.msra.mxu0 0.0
        %1478 = vmatprep.mubr.f32.mxu0 0.0
        %1479 = vmatmul.mubr.f32.gmra.mxu0 %v1412
        %v1480 = vpop.f32.mrf.mxu0
        %v1481 = vadd.f32 0.0, %v1480
        %v1482 = vpop.f32.mrf.mxu0
        %1483 = vdwg.mxu0
        %v1485 = vsel %vm844, %v1481, 0
        %1487 = vmatprep.subr.mxu0 0.0
        %1488 = vmatpush1.msra.mxu0 0.0
        %1489 = vmatprep.subr.mxu0 0.0
        %1490 = vmatpush1.msra.mxu0 0.0
        %1491 = vmatprep.subr.mxu0 0.0
        %1492 = vmatpush1.msra.mxu0 0.0
        %1493 = vmatprep.subr.mxu0 0.0
        %1494 = vmatpush1.msra.mxu0 0.0
        %1495 = vmatprep.subr.mxu0 0.0
        %1496 = vmatpush1.msra.mxu0 0.0
        %1497 = vmatprep.subr.mxu0 0.0
        %1498 = vmatpush1.msra.mxu0 0.0
        %1499 = vmatprep.subr.mxu0 0.0
        %1500 = vmatpush1.msra.mxu0 0.0
        %1501 = vmatprep.subr.mxu0 0.0
        %1502 = vmatpush1.msra.mxu0 0.0
        %1503 = vmatprep.subr.mxu0 0.0
        %1504 = vmatpush1.msra.mxu0 0.0
        %1505 = vmatprep.subr.mxu0 0.0
        %1506 = vmatpush1.msra.mxu0 0.0
        %1507 = vmatprep.subr.mxu0 0.0
        %1508 = vmatpush1.msra.mxu0 0.0
        %1509 = vmatprep.subr.mxu0 0.0
        %1510 = vmatpush1.msra.mxu0 0.0
        %1511 = vmatprep.subr.mxu0 0.0
        %1512 = vmatpush1.msra.mxu0 0.0
        %1513 = vmatprep.subr.mxu0 0.0
        %1514 = vmatpush1.msra.mxu0 0.0
        %1515 = vmatprep.subr.mxu0 0.0
        %1516 = vmatpush1.msra.mxu0 0.0
        %1517 = vmatprep.subr.mxu0 0.0
        %1518 = vmatpush1.msra.mxu0 %v835
        %1519 = vmatprep.subr.mxu0 0.0
        %1520 = vmatpush2.msra.mxu0 0.0
        %1521 = vmatprep.subr.mxu0 0.0
        %1522 = vmatpush2.msra.mxu0 0.0
        %1523 = vmatprep.subr.mxu0 0.0
        %1524 = vmatpush2.msra.mxu0 0.0
        %1525 = vmatprep.subr.mxu0 0.0
        %1526 = vmatpush2.msra.mxu0 0.0
        %1527 = vmatprep.subr.mxu0 0.0
        %1528 = vmatpush2.msra.mxu0 0.0
        %1529 = vmatprep.subr.mxu0 0.0
        %1530 = vmatpush2.msra.mxu0 0.0
        %1531 = vmatprep.subr.mxu0 0.0
        %1532 = vmatpush2.msra.mxu0 0.0
        %1533 = vmatprep.subr.mxu0 0.0
        %1534 = vmatpush2.msra.mxu0 0.0
        %1535 = vmatprep.subr.mxu0 0.0
        %1536 = vmatpush2.msra.mxu0 0.0
        %1537 = vmatprep.subr.mxu0 0.0
        %1538 = vmatpush2.msra.mxu0 0.0
        %1539 = vmatprep.subr.mxu0 0.0
        %1540 = vmatpush2.msra.mxu0 0.0
        %1541 = vmatprep.subr.mxu0 0.0
        %1542 = vmatpush2.msra.mxu0 0.0
        %1543 = vmatprep.subr.mxu0 0.0
        %1544 = vmatpush2.msra.mxu0 0.0
        %1545 = vmatprep.subr.mxu0 0.0
        %1546 = vmatpush2.msra.mxu0 0.0
        %1547 = vmatprep.subr.mxu0 0.0
        %1548 = vmatpush2.msra.mxu0 0.0
        %1549 = vmatprep.subr.mxu0 0.0
        %1550 = vmatpush2.msra.mxu0 0.0
        %1551 = vmatprep.mubr.f32.mxu0 0.0
        %1552 = vmatmul.mubr.f32.gmra.mxu0 %v1485
        %v1553 = vpop.f32.mrf.mxu0
        %v1554 = vadd.f32 0.0, %v1553
        %v1555 = vpop.f32.mrf.mxu0
        %1556 = vdwg.mxu0
        %v1557 = vadd.f32 %v1318, %v1554
        %1558 = vrot.lane.b32.xlu0 %v663, 104
        %v1559 = vpop.permute.xlu0 %1558
        %1560 = vrot.lane.b32.xlu0 %v745, 104
        %v1561 = vpop.permute.xlu0 %1560
        %v1562 = vsel %vm844, %v1559, 0
        %v1564 = vsel %vm844, %v1561, 0
        %1566 = vmatprep.subr.mxu0 0.0
        %1567 = vmatpush1.xpose.msra.mxu0 0.0
        %1568 = vmatprep.subr.mxu0 0.0
        %1569 = vmatpush1.xpose.msra.mxu0 0.0
        %1570 = vmatprep.subr.mxu0 0.0
        %1571 = vmatpush1.xpose.msra.mxu0 0.0
        %1572 = vmatprep.subr.mxu0 0.0
        %1573 = vmatpush1.xpose.msra.mxu0 0.0
        %1574 = vmatprep.subr.mxu0 0.0
        %1575 = vmatpush1.xpose.msra.mxu0 0.0
        %1576 = vmatprep.subr.mxu0 0.0
        %1577 = vmatpush1.xpose.msra.mxu0 0.0
        %1578 = vmatprep.subr.mxu0 0.0
        %1579 = vmatpush1.xpose.msra.mxu0 0.0
        %1580 = vmatprep.subr.mxu0 0.0
        %1581 = vmatpush1.xpose.msra.mxu0 0.0
        %1582 = vmatprep.subr.mxu0 0.0
        %1583 = vmatpush1.xpose.msra.mxu0 0.0
        %1584 = vmatprep.subr.mxu0 0.0
        %1585 = vmatpush1.xpose.msra.mxu0 0.0
        %1586 = vmatprep.subr.mxu0 0.0
        %1587 = vmatpush1.xpose.msra.mxu0 0.0
        %1588 = vmatprep.subr.mxu0 0.0
        %1589 = vmatpush1.xpose.msra.mxu0 0.0
        %1590 = vmatprep.subr.mxu0 0.0
        %1591 = vmatpush1.xpose.msra.mxu0 0.0
        %1592 = vmatprep.subr.mxu0 0.0
        %1593 = vmatpush1.xpose.msra.mxu0 0.0
        %1594 = vmatprep.subr.mxu0 0.0
        %1595 = vmatpush1.xpose.msra.mxu0 0.0
        %1596 = vmatprep.subr.mxu0 0.0
        %1597 = vmatpush1.xpose.msra.mxu0 %v1564
        %1598 = vmatprep.subr.mxu0 0.0
        %1599 = vmatpush2.xpose.msra.mxu0 0.0
        %1600 = vmatprep.subr.mxu0 0.0
        %1601 = vmatpush2.xpose.msra.mxu0 0.0
        %1602 = vmatprep.subr.mxu0 0.0
        %1603 = vmatpush2.xpose.msra.mxu0 0.0
        %1604 = vmatprep.subr.mxu0 0.0
        %1605 = vmatpush2.xpose.msra.mxu0 0.0
        %1606 = vmatprep.subr.mxu0 0.0
        %1607 = vmatpush2.xpose.msra.mxu0 0.0
        %1608 = vmatprep.subr.mxu0 0.0
        %1609 = vmatpush2.xpose.msra.mxu0 0.0
        %1610 = vmatprep.subr.mxu0 0.0
        %1611 = vmatpush2.xpose.msra.mxu0 0.0
        %1612 = vmatprep.subr.mxu0 0.0
        %1613 = vmatpush2.xpose.msra.mxu0 0.0
        %1614 = vmatprep.subr.mxu0 0.0
        %1615 = vmatpush2.xpose.msra.mxu0 0.0
        %1616 = vmatprep.subr.mxu0 0.0
        %1617 = vmatpush2.xpose.msra.mxu0 0.0
        %1618 = vmatprep.subr.mxu0 0.0
        %1619 = vmatpush2.xpose.msra.mxu0 0.0
        %1620 = vmatprep.subr.mxu0 0.0
        %1621 = vmatpush2.xpose.msra.mxu0 0.0
        %1622 = vmatprep.subr.mxu0 0.0
        %1623 = vmatpush2.xpose.msra.mxu0 0.0
        %1624 = vmatprep.subr.mxu0 0.0
        %1625 = vmatpush2.xpose.msra.mxu0 0.0
        %1626 = vmatprep.subr.mxu0 0.0
        %1627 = vmatpush2.xpose.msra.mxu0 0.0
        %1628 = vmatprep.subr.mxu0 0.0
        %1629 = vmatpush2.xpose.msra.mxu0 0.0
        %1630 = vmatprep.mubr.f32.mxu0 0.0
        %1631 = vmatmul.mubr.f32.gmra.mxu0 %v1562
        %v1632 = vpop.f32.mrf.mxu0
        %v1633 = vadd.f32 %v832, %v1632
        %v1634 = vpop.f32.mrf.mxu0
        %1635 = vdwg.mxu0
        %v1636 = vsel %vm844, %v1633, -inf
        %1637 = vmax.xlane.f32.xlu0 %v1636
        %v1638 = vpop.xlane.xlu0 %1637
        %v1639 = vsub.f32 %v1633, %v1638
        %v1640 = vmul.f32 %v1639, 1.442695
        %v1641 = vpow.pop %v1640
        %v1642 = vsel %vm844, %v1641, 0.0
        %1643 = vadd.xlane.f32.xlu0 %v1642
        %v1644 = vpop.xlane.xlu0 %1643
        %v1645 = vrcp.pop %v1644
        %v1646 = vmul.f32 %v1641, %v1645
        %1647 = vrot.lane.b32.xlu0 %v829, 104
        %v1648 = vpop.permute.xlu0 %1647
        %v1651 = vsel %vm844, %v1646, 0
        %1653 = vmatprep.subr.mxu0 0.0
        %1654 = vmatpush1.msra.mxu0 0.0
        %1655 = vmatprep.subr.mxu0 0.0
        %1656 = vmatpush1.msra.mxu0 0.0
        %1657 = vmatprep.subr.mxu0 0.0
        %1658 = vmatpush1.msra.mxu0 0.0
        %1659 = vmatprep.subr.mxu0 0.0
        %1660 = vmatpush1.msra.mxu0 0.0
        %1661 = vmatprep.subr.mxu0 0.0
        %1662 = vmatpush1.msra.mxu0 0.0
        %1663 = vmatprep.subr.mxu0 0.0
        %1664 = vmatpush1.msra.mxu0 0.0
        %1665 = vmatprep.subr.mxu0 0.0
        %1666 = vmatpush1.msra.mxu0 0.0
        %1667 = vmatprep.subr.mxu0 0.0
        %1668 = vmatpush1.msra.mxu0 0.0
        %1669 = vmatprep.subr.mxu0 0.0
        %1670 = vmatpush1.msra.mxu0 0.0
        %1671 = vmatprep.subr.mxu0 0.0
        %1672 = vmatpush1.msra.mxu0 0.0
        %1673 = vmatprep.subr.mxu0 0.0
        %1674 = vmatpush1.msra.mxu0 0.0
        %1675 = vmatprep.subr.mxu0 0.0
        %1676 = vmatpush1.msra.mxu0 0.0
        %1677 = vmatprep.subr.mxu0 0.0
        %1678 = vmatpush1.msra.mxu0 0.0
        %1679 = vmatprep.subr.mxu0 0.0
        %1680 = vmatpush1.msra.mxu0 0.0
        %1681 = vmatprep.subr.mxu0 0.0
        %1682 = vmatpush1.msra.mxu0 0.0
        %1683 = vmatprep.subr.mxu0 0.0
        %1684 = vmatpush1.msra.mxu0 %v1648
        %1685 = vmatprep.subr.mxu0 0.0
        %1686 = vmatpush2.msra.mxu0 0.0
        %1687 = vmatprep.subr.mxu0 0.0
        %1688 = vmatpush2.msra.mxu0 0.0
        %1689 = vmatprep.subr.mxu0 0.0
        %1690 = vmatpush2.msra.mxu0 0.0
        %1691 = vmatprep.subr.mxu0 0.0
        %1692 = vmatpush2.msra.mxu0 0.0
        %1693 = vmatprep.subr.mxu0 0.0
        %1694 = vmatpush2.msra.mxu0 0.0
        %1695 = vmatprep.subr.mxu0 0.0
        %1696 = vmatpush2.msra.mxu0 0.0
        %1697 = vmatprep.subr.mxu0 0.0
        %1698 = vmatpush2.msra.mxu0 0.0
        %1699 = vmatprep.subr.mxu0 0.0
        %1700 = vmatpush2.msra.mxu0 0.0
        %1701 = vmatprep.subr.mxu0 0.0
        %1702 = vmatpush2.msra.mxu0 0.0
        %1703 = vmatprep.subr.mxu0 0.0
        %1704 = vmatpush2.msra.mxu0 0.0
        %1705 = vmatprep.subr.mxu0 0.0
        %1706 = vmatpush2.msra.mxu0 0.0
        %1707 = vmatprep.subr.mxu0 0.0
        %1708 = vmatpush2.msra.mxu0 0.0
        %1709 = vmatprep.subr.mxu0 0.0
        %1710 = vmatpush2.msra.mxu0 0.0
        %1711 = vmatprep.subr.mxu0 0.0
        %1712 = vmatpush2.msra.mxu0 0.0
        %1713 = vmatprep.subr.mxu0 0.0
        %1714 = vmatpush2.msra.mxu0 0.0
        %1715 = vmatprep.subr.mxu0 0.0
        %1716 = vmatpush2.msra.mxu0 0.0
        %1717 = vmatprep.mubr.f32.mxu0 0.0
        %1718 = vmatmul.mubr.f32.gmra.mxu0 %v1651
        %v1719 = vpop.f32.mrf.mxu0
        %v1720 = vadd.f32 0.0, %v1719
        %v1721 = vpop.f32.mrf.mxu0
        %1722 = vdwg.mxu0
        %v1724 = vsel %vm844, %v1720, 0
        %1726 = vmatprep.subr.mxu0 0.0
        %1727 = vmatpush1.msra.mxu0 0.0
        %1728 = vmatprep.subr.mxu0 0.0
        %1729 = vmatpush1.msra.mxu0 0.0
        %1730 = vmatprep.subr.mxu0 0.0
        %1731 = vmatpush1.msra.mxu0 0.0
        %1732 = vmatprep.subr.mxu0 0.0
        %1733 = vmatpush1.msra.mxu0 0.0
        %1734 = vmatprep.subr.mxu0 0.0
        %1735 = vmatpush1.msra.mxu0 0.0
        %1736 = vmatprep.subr.mxu0 0.0
        %1737 = vmatpush1.msra.mxu0 0.0
        %1738 = vmatprep.subr.mxu0 0.0
        %1739 = vmatpush1.msra.mxu0 0.0
        %1740 = vmatprep.subr.mxu0 0.0
        %1741 = vmatpush1.msra.mxu0 0.0
        %1742 = vmatprep.subr.mxu0 0.0
        %1743 = vmatpush1.msra.mxu0 0.0
        %1744 = vmatprep.subr.mxu0 0.0
        %1745 = vmatpush1.msra.mxu0 0.0
        %1746 = vmatprep.subr.mxu0 0.0
        %1747 = vmatpush1.msra.mxu0 0.0
        %1748 = vmatprep.subr.mxu0 0.0
        %1749 = vmatpush1.msra.mxu0 0.0
        %1750 = vmatprep.subr.mxu0 0.0
        %1751 = vmatpush1.msra.mxu0 0.0
        %1752 = vmatprep.subr.mxu0 0.0
        %1753 = vmatpush1.msra.mxu0 0.0
        %1754 = vmatprep.subr.mxu0 0.0
        %1755 = vmatpush1.msra.mxu0 0.0
        %1756 = vmatprep.subr.mxu0 0.0
        %1757 = vmatpush1.msra.mxu0 %v836
        %1758 = vmatprep.subr.mxu0 0.0
        %1759 = vmatpush2.msra.mxu0 0.0
        %1760 = vmatprep.subr.mxu0 0.0
        %1761 = vmatpush2.msra.mxu0 0.0
        %1762 = vmatprep.subr.mxu0 0.0
        %1763 = vmatpush2.msra.mxu0 0.0
        %1764 = vmatprep.subr.mxu0 0.0
        %1765 = vmatpush2.msra.mxu0 0.0
        %1766 = vmatprep.subr.mxu0 0.0
        %1767 = vmatpush2.msra.mxu0 0.0
        %1768 = vmatprep.subr.mxu0 0.0
        %1769 = vmatpush2.msra.mxu0 0.0
        %1770 = vmatprep.subr.mxu0 0.0
        %1771 = vmatpush2.msra.mxu0 0.0
        %1772 = vmatprep.subr.mxu0 0.0
        %1773 = vmatpush2.msra.mxu0 0.0
        %1774 = vmatprep.subr.mxu0 0.0
        %1775 = vmatpush2.msra.mxu0 0.0
        %1776 = vmatprep.subr.mxu0 0.0
        %1777 = vmatpush2.msra.mxu0 0.0
        %1778 = vmatprep.subr.mxu0 0.0
        %1779 = vmatpush2.msra.mxu0 0.0
        %1780 = vmatprep.subr.mxu0 0.0
        %1781 = vmatpush2.msra.mxu0 0.0
        %1782 = vmatprep.subr.mxu0 0.0
        %1783 = vmatpush2.msra.mxu0 0.0
        %1784 = vmatprep.subr.mxu0 0.0
        %1785 = vmatpush2.msra.mxu0 0.0
        %1786 = vmatprep.subr.mxu0 0.0
        %1787 = vmatpush2.msra.mxu0 0.0
        %1788 = vmatprep.subr.mxu0 0.0
        %1789 = vmatpush2.msra.mxu0 0.0
        %1790 = vmatprep.mubr.f32.mxu0 0.0
        %1791 = vmatmul.mubr.f32.gmra.mxu0 %v1724
        %v1792 = vpop.f32.mrf.mxu0
        %v1793 = vadd.f32 0.0, %v1792
        %v1794 = vpop.f32.mrf.mxu0
        %1795 = vdwg.mxu0
        %v1796 = vadd.f32 %v1557, %v1793
        %1797 = vst.msk [vmem:[%s570] sm:$0xff] %vm589, %v1796
        %s1798 = sand.u32 %s314, 1
        %s1799 = scalar_lea.sflag [#allocation4], %s1798
        %s1800 = sand.u32 %s314, 1
        %s1801 = smul.addr %s1800, 8
        %s1802 = scalar_lea.vmem [#allocation14], %s1801
        // Predicated region
        $region97: #{full_attn.1} parent=67 // pred_check
          %p1803 = pneg %p324
        $region98: #{full_attn.1} parent=67 // pred_check_branch
          %1805 = sbr.rel (%p1803) target = $region100
        $region99: #{full_attn.1} parent=67 // pred_region
          %s1807 = ssub.s32 128, 128
          %1808 = vsyncadd %s1799, %s1807
          %s1809 = smul.addr %s34, 128
          %s1810 = scalar_lea.hbm %s12, %s1809
          %s1812 = sshll.u32 %s1802, 4
          %s1813 = int_to_ptr.vmem [resolvable:$true] %s1812
          %1815 = dma.vmem_to_hbm [thread:$0]  %s1813, 128, %s1810, %s1799
        $region100: #{full_attn.1} parent=67 // pred_fallthru
          _
      $region68: #{full_attn.1} parent=5 // pred_fallthru
        _
      %p1816 = scmp.le.s32.totalorder 2, %s29
      // Predicated region
      $region101: #{full_attn.1} parent=5 // pred_check
        %p1817 = pneg %p1816
      $region102: #{full_attn.1} parent=5 // pred_check_branch
        %1819 = sbr.rel (%p1817) target = $region104
      $region103: #{full_attn.1} parent=5 // pred_region
        %s1820 = ssub.s32 %s29, 2
        // Predicated region
        $region105: #{full_attn.1} parent=103 // pred_check
          %p1821 = pneg %p330
        $region106: #{full_attn.1} parent=103 // pred_check_branch
          %1823 = sbr.rel (%p1821) target = $region108
        $region107: #{full_attn.1} parent=103 // pred_region
          %s1824 = sand.u32 %s315, 1
          %s1825 = scalar_lea.sflag [#allocation4], %s1824
          %s1826 = sand.u32 %s315, 1
          %s1827 = smul.addr %s1826, 8
          %s1828 = scalar_lea.vmem [#allocation14], %s1827
          %1829 = dma.done %s1825, 128
        $region108: #{full_attn.1} parent=103 // pred_fallthru
          _
      $region104: #{full_attn.1} parent=5 // pred_fallthru
        _
    $region6: #{full_attn.1} parent=1 // loop_footer
      %s33 = sadd.s32 1, %s29
    $region7: #{full_attn.1} parent=1 // loop_footer_branch
      %28 = sbr.rel target = $region3
    $region8: #{full_attn.1} parent=1 // loop_exit
      _
    %1830 = vsyncpa [#allocation3], 1
    %s1831 = scalar_lea.sflag [#allocation3], 1
    %1832 = vsyncpa %s1831, 1
    %1833 = vsyncpa [#allocation6], 1
    %s1834 = scalar_lea.sflag [#allocation6], 1
    %1835 = vsyncpa %s1834, 1
    %1836 = vsyncpa [#allocation9], 1
    %1837 = vsyncpa [#allocation12], 1
    %1838 = vsyncpa [#allocation4], 1
    %s1839 = scalar_lea.sflag [#allocation4], 1
    %1840 = vsyncpa %s1839, 1

</llo_original>
